<compile_context>
chip_gen: v7x
topology: tpu7x:2x2x1
jax: 0.10.0
libtpu: 0.0.40
codegen_flags: <defaults>
</compile_context>

<pallas_src>
import functools
import math

import jax
import jax.numpy as jnp
from jax.experimental import pallas as pl
from jax.experimental.pallas import tpu as pltpu


LN_EPS = 1e-12
COMPUTE_DTYPE = jnp.bfloat16      # MXU operand dtype & inter-layer residual stream
VMEM_LIMIT_BYTES = 48 * 1024 * 1024


# ----------------------------------------------------------------------------
# In-kernel helpers (operate on values, not refs)
# ----------------------------------------------------------------------------

def _layernorm(x, g, b, eps):
    mu = jnp.mean(x, axis=-1, keepdims=True)
    var = jnp.mean(jnp.square(x - mu), axis=-1, keepdims=True)
    return (x - mu) * jax.lax.rsqrt(var + eps) * g + b


def _gelu_erf(x):
    # exact (erf) GELU for parity with HF BERT.  On v6e/v7x, jax.nn.gelu(
    # approximate=True) would move this to the (idle-during-FFN) EUP slot.
    return 0.5 * x * (1.0 + jax.lax.erf(x * (1.0 / math.sqrt(2.0))))


# ----------------------------------------------------------------------------
# Pallas kernels
# ----------------------------------------------------------------------------

def _layernorm_kernel(x_ref, g_ref, b_ref, o_ref, *, eps):
    """Row-tiled LayerNorm (embedding output); f32 math, bf16 store."""
    o_ref[...] = _layernorm(x_ref[...], g_ref[...], b_ref[...], eps).astype(o_ref.dtype)


def _encoder_layer_kernel(
    x_ref, mask_ref,
    wqkv_ref, bqkv_ref, wo_ref, bo_ref, ln1g_ref, ln1b_ref,
    w1_ref, b1_ref, w2_ref, b2_ref, ln2g_ref, ln2b_ref,
    o_ref, ctx_ref, *, num_heads, head_dim, eps):
    """One full BERT encoder layer for one batch element's tokens (S, H)."""
    xc = x_ref[0]                                   # (S, H) bf16 residual stream
    x = xc.astype(jnp.float32)                      # f32 copy for residual adds / LN
    mask = mask_ref[0]                              # (1, S) additive key-mask bias

    hidden = num_heads * head_dim

    # ---- QKV projection: ONE lane-dense matmul, N = 3H (scale folded into Wq/bq).
    qkv = jnp.dot(xc, wqkv_ref[...],
                  preferred_element_type=jnp.float32) + bqkv_ref[...]   # (S, 3H) f32

    # ---- per-head attention; each head's context goes straight into the VMEM
    #      scratch at a static lane offset (no per-head out-proj, no concat).
    #      Static Python loop keeps slices static; at bert-base (12 heads) convert
    #      to lax.fori_loop(unroll=True) + pl.ds stores to bound live ranges.
    for h in range(num_heads):
        lo = h * head_dim
        q = qkv[:, lo:lo + head_dim]                                    # (S, hd)
        k = qkv[:, hidden + lo:hidden + lo + head_dim]
        v = qkv[:, 2 * hidden + lo:2 * hidden + lo + head_dim]
        # q @ k^T via dot_general contracting last dims (no explicit transpose).
        s = jax.lax.dot_general(q, k, (((1,), (1,)), ((), ())),
                                preferred_element_type=jnp.float32)     # (S, S)
        s = s + mask
        s = s - jnp.max(s, axis=-1, keepdims=True)
        p = jnp.exp(s)
        p = p * pl.reciprocal(jnp.sum(p, axis=-1, keepdims=True), approx=True)
        ctx = jnp.dot(p.astype(COMPUTE_DTYPE), v.astype(COMPUTE_DTYPE),
                      preferred_element_type=jnp.float32)               # (S, hd)
        ctx_ref[:, lo:lo + head_dim] = ctx

    # ---- ONE output-projection matmul: (S, H) @ (H, H)
    attn = jnp.dot(ctx_ref[...].astype(COMPUTE_DTYPE), wo_ref[...],
                   preferred_element_type=jnp.float32) + bo_ref[...]

    # ---- residual + LayerNorm 1 (fused, no HBM round trip)
    h1 = _layernorm(x + attn, ln1g_ref[...], ln1b_ref[...], eps)

    # ---- feed-forward (GELU) + residual + LayerNorm 2 (fused)
    ff = jnp.dot(h1.astype(COMPUTE_DTYPE), w1_ref[...],
                 preferred_element_type=jnp.float32) + b1_ref[...]
    ff = _gelu_erf(ff)
    ff = jnp.dot(ff.astype(COMPUTE_DTYPE), w2_ref[...],
                 preferred_element_type=jnp.float32) + b2_ref[...]
    o_ref[0] = _layernorm(h1 + ff, ln2g_ref[...], ln2b_ref[...], eps).astype(o_ref.dtype)


def _pooler_head_kernel(x_ref, pw_ref, pb_ref, fw_ref, fb_ref, o_ref):
    """pooled = tanh(x @ Wp + bp); dropout(identity, eval); fc (lane-padded); log_softmax."""
    x = x_ref[...]                                                      # (B, H) bf16
    pooled = jnp.tanh(jnp.dot(x, pw_ref[...], preferred_element_type=jnp.float32)
                      + pb_ref[...])
    logits = jnp.dot(pooled.astype(COMPUTE_DTYPE), fw_ref[...],
                     preferred_element_type=jnp.float32) + fb_ref[...]  # (B, C_pad)
    z = logits - jnp.max(logits, axis=-1, keepdims=True)
    o_ref[...] = z - jnp.log(jnp.sum(jnp.exp(z), axis=-1, keepdims=True))


# ----------------------------------------------------------------------------
# Pallas wrappers
# ----------------------------------------------------------------------------

def pallas_layernorm(x, gamma, beta, *, out_dtype, eps=LN_EPS, tile_m=256):
    """Row-tiled LayerNorm over a (M, H) slab.  x is f32; output dtype is `out_dtype`."""
    M, H = x.shape
    if M % tile_m != 0:
        tile_m = M                      # toy-scale / non-divisible fallback
    return pl.pallas_call(
        functools.partial(_layernorm_kernel, eps=eps),
        out_shape=jax.ShapeDtypeStruct((M, H), out_dtype),
        grid=(M // tile_m,),
        in_specs=[
            pl.BlockSpec((tile_m, H), lambda i: (i, 0)),
            pl.BlockSpec((1, H), lambda i: (0, 0)),
            pl.BlockSpec((1, H), lambda i: (0, 0)),
        ],
        out_specs=pl.BlockSpec((tile_m, H), lambda i: (i, 0)),
        compiler_params=pltpu.CompilerParams(
            dimension_semantics=("parallel",),
            vmem_limit_bytes=VMEM_LIMIT_BYTES),
    )(x, gamma.reshape(1, H), beta.reshape(1, H))


def pallas_encoder_layer(x, mask_bias, lp, *, batch, seq, num_heads, head_dim,
                         intermediate, eps=LN_EPS):
    """x: [B, S, H] bf16, mask_bias: [B, 1, S] f32 -> [B, S, H] bf16.

    Grid is over the batch axis ("parallel" -> megacore / v7x 2-TC sharding).
    All layer weights use constant index_maps so they stay VMEM-resident.
    At bert-base on v7x one would additionally (a) add a token-tile grid axis
    (queries tiled, keys/values full-sequence), (b) put pipeline_mode=
    pl.Buffered(1) on the constant weight specs, and (c) on v5e tile the FFN
    intermediate axis to fit the scoped-VMEM budget.
    """
    hidden = num_heads * head_dim

    def const_spec(shape):                 # weights: same block every grid step
        zeros = (0,) * len(shape)
        return pl.BlockSpec(shape, lambda b: zeros)

    kernel = functools.partial(
        _encoder_layer_kernel, num_heads=num_heads, head_dim=head_dim, eps=eps)

    return pl.pallas_call(
        kernel,
        out_shape=jax.ShapeDtypeStruct((batch, seq, hidden), COMPUTE_DTYPE),
        grid=(batch,),
        in_specs=[
            pl.BlockSpec((1, seq, hidden), lambda b: (b, 0, 0)),      # x of batch b
            pl.BlockSpec((1, 1, seq), lambda b: (b, 0, 0)),           # mask bias of batch b
            const_spec((hidden, 3 * hidden)),                         # wqkv (Wq|Wk|Wv, bf16)
            const_spec((1, 3 * hidden)),                              # bqkv (f32)
            const_spec((hidden, hidden)),                             # wo
            const_spec((1, hidden)),                                  # bo
            const_spec((1, hidden)), const_spec((1, hidden)),         # ln1 g, b
            const_spec((hidden, intermediate)), const_spec((1, intermediate)),  # w1, b1
            const_spec((intermediate, hidden)), const_spec((1, hidden)),        # w2, b2
            const_spec((1, hidden)), const_spec((1, hidden)),         # ln2 g, b
        ],
        out_specs=pl.BlockSpec((1, seq, hidden), lambda b: (b, 0, 0)),
        scratch_shapes=[pltpu.VMEM((seq, hidden), jnp.float32)],      # per-head ctx slab
        compiler_params=pltpu.CompilerParams(
            dimension_semantics=("parallel",),
            vmem_limit_bytes=VMEM_LIMIT_BYTES),
    )(x, mask_bias,
      lp["wqkv"], lp["bqkv"], lp["wo"], lp["bo"],
      lp["ln1_g"], lp["ln1_b"],
      lp["w1"], lp["b1"], lp["w2"], lp["b2"],
      lp["ln2_g"], lp["ln2_b"])


def pallas_pooler_head(x, pool_w, pool_b, fc_w_pad, fc_b_pad):
    """x: [B, H] bf16 (hidden state of token 0) -> log-probs [B, C_pad] f32."""
    B, H = x.shape
    C_pad = fc_w_pad.shape[1]
    return pl.pallas_call(
        _pooler_head_kernel,
        out_shape=jax.ShapeDtypeStruct((B, C_pad), jnp.float32),
        grid=(1,),
        in_specs=[
            pl.BlockSpec((B, H), lambda i: (0, 0)),
            pl.BlockSpec((H, H), lambda i: (0, 0)),
            pl.BlockSpec((1, H), lambda i: (0, 0)),
            pl.BlockSpec((H, C_pad), lambda i: (0, 0)),
            pl.BlockSpec((1, C_pad), lambda i: (0, 0)),
        ],
        out_specs=pl.BlockSpec((B, C_pad), lambda i: (0, 0)),
        compiler_params=pltpu.CompilerParams(vmem_limit_bytes=VMEM_LIMIT_BYTES),
    )(x, pool_w, pool_b, fc_w_pad, fc_b_pad)


# ----------------------------------------------------------------------------
# Synthetic BERT model (small config) with deterministic parameter init
# ----------------------------------------------------------------------------

CFG = dict(
    vocab_size=128,
    max_position=64,
    type_vocab_size=2,
    hidden=32,
    num_heads=4,
    head_dim=8,
    intermediate=64,
    num_layers=2,
    classes=36,
)


def init_params(key, cfg):
    """Raw BERT-shaped parameters (f32), matching the PyTorch parametrization."""
    std = 0.02

    def nrm(k, shape):
        return std * jax.random.normal(k, shape, dtype=jnp.float32)

    keys = iter(jax.random.split(key, 256))
    p = {
        "word_emb": nrm(next(keys), (cfg["vocab_size"], cfg["hidden"])),
        "pos_emb": nrm(next(keys), (cfg["max_position"], cfg["hidden"])),
        "type_emb": nrm(next(keys), (cfg["type_vocab_size"], cfg["hidden"])),
        "emb_ln_g": jnp.ones((cfg["hidden"],), jnp.float32),
        "emb_ln_b": jnp.zeros((cfg["hidden"],), jnp.float32),
        "layers": [],
        "pool_w": nrm(next(keys), (cfg["hidden"], cfg["hidden"])),
        "pool_b": jnp.zeros((cfg["hidden"],), jnp.float32),
        "fc_w": nrm(next(keys), (cfg["hidden"], cfg["classes"])),
        "fc_b": jnp.zeros((cfg["classes"],), jnp.float32),
    }
    for _ in range(cfg["num_layers"]):
        layer = {
            "wq": nrm(next(keys), (cfg["hidden"], cfg["hidden"])),
            "bq": jnp.zeros((cfg["hidden"],), jnp.float32),
            "wk": nrm(next(keys), (cfg["hidden"], cfg["hidden"])),
            "bk": jnp.zeros((cfg["hidden"],), jnp.float32),
            "wv": nrm(next(keys), (cfg["hidden"], cfg["hidden"])),
            "bv": jnp.zeros((cfg["hidden"],), jnp.float32),
            "wo": nrm(next(keys), (cfg["hidden"], cfg["hidden"])),
            "bo": jnp.zeros((cfg["hidden"],), jnp.float32),
            "ln1_g": jnp.ones((cfg["hidden"],), jnp.float32),
            "ln1_b": jnp.zeros((cfg["hidden"],), jnp.float32),
            "w1": nrm(next(keys), (cfg["hidden"], cfg["intermediate"])),
            "b1": jnp.zeros((cfg["intermediate"],), jnp.float32),
            "w2": nrm(next(keys), (cfg["intermediate"], cfg["hidden"])),
            "b2": jnp.zeros((cfg["hidden"],), jnp.float32),
            "ln2_g": jnp.ones((cfg["hidden"],), jnp.float32),
            "ln2_b": jnp.zeros((cfg["hidden"],), jnp.float32),
        }
        p["layers"].append(layer)
    return p


def prepare_params(params, cfg):
    """One-time repack into kernel-friendly layout (outside the hot path):
       * Wq|Wk|Wv fused into one (H, 3H) bf16 block; 1/sqrt(hd) folded into Wq/bq.
       * FFN / pooler / fc matmul weights in bf16; biases + LN params in f32.
       * Classifier weight lane-padded to 128 columns, padded bias = -1e30 so the
         padded logits vanish under softmax (sliced off outside the kernel)."""
    H, nh, hd = cfg["hidden"], cfg["num_heads"], cfg["head_dim"]
    C = cfg["classes"]
    C_pad = ((C + 127) // 128) * 128
    cd = COMPUTE_DTYPE
    scale = 1.0 / math.sqrt(hd)

    fc_w_pad = jnp.zeros((H, C_pad), jnp.float32).at[:, :C].set(params["fc_w"])
    fc_b_pad = jnp.full((C_pad,), -1e30, jnp.float32).at[:C].set(params["fc_b"])

    out = {
        "word_emb": params["word_emb"],
        "pos_emb": params["pos_emb"],
        "type_emb": params["type_emb"],
        "emb_ln_g": params["emb_ln_g"],
        "emb_ln_b": params["emb_ln_b"],
        "pool_w": params["pool_w"].astype(cd),
        "pool_b": params["pool_b"].reshape(1, H),
        "fc_w_pad": fc_w_pad.astype(cd),
        "fc_b_pad": fc_b_pad.reshape(1, C_pad),
        "layers": [],
    }
    # TODO(synk): v7x could quantize w1/w2 to fp8 with per-channel scales here.
    for l in params["layers"]:
        wqkv = jnp.concatenate([l["wq"] * scale, l["wk"], l["wv"]], axis=1)   # (H, 3H)
        bqkv = jnp.concatenate([l["bq"] * scale, l["bk"], l["bv"]])           # (3H,)
        out["layers"].append({
            "wqkv": wqkv.astype(cd),
            "bqkv": bqkv.reshape(1, 3 * H),
            "wo": l["wo"].astype(cd),                                         # (H, H)
            "bo": l["bo"].reshape(1, H),
            "ln1_g": l["ln1_g"].reshape(1, H),
            "ln1_b": l["ln1_b"].reshape(1, H),
            "w1": l["w1"].astype(cd),
            "b1": l["b1"].reshape(1, -1),
            "w2": l["w2"].astype(cd),
            "b2": l["b2"].reshape(1, H),
            "ln2_g": l["ln2_g"].reshape(1, H),
            "ln2_b": l["ln2_b"].reshape(1, H),
        })
    return out


def bert_forward(prepared, input_ids, attention_mask, token_type_ids, cfg):
    B, S = input_ids.shape
    H, nh, hd = cfg["hidden"], cfg["num_heads"], cfg["head_dim"]

    # ---- embeddings: table gathers are XLA glue; sum + LayerNorm in Pallas ----
    # TODO(synk): embedding gathers could be a scalar-prefetch DMA kernel; left
    # to XLA since they are tiny data-dependent lookups here.
    positions = jnp.arange(S, dtype=jnp.int32)
    emb = (prepared["word_emb"][input_ids]
           + prepared["pos_emb"][positions][None, :, :]
           + prepared["type_emb"][token_type_ids])                      # [B, S, H] f32
    x = pallas_layernorm(emb.reshape(B * S, H),
                         prepared["emb_ln_g"], prepared["emb_ln_b"],
                         out_dtype=COMPUTE_DTYPE)                       # [B*S, H] bf16
    x = x.reshape(B, S, H)

    # additive key mask, kept per batch (NOT broadcast to B*heads): [B, 1, S]
    mask_bias = ((1.0 - attention_mask.astype(jnp.float32)) * -10000.0)[:, None, :]

    # ---- encoder: ONE fused pallas_call per layer; residual stream in bf16 ----
    for lp in prepared["layers"]:
        x = pallas_encoder_layer(x, mask_bias, lp, batch=B, seq=S,
                                 num_heads=nh, head_dim=hd,
                                 intermediate=cfg["intermediate"])

    # ---- pooler (tanh on token 0) + dropout(identity, eval) + fc + log_softmax,
    #      fused into one kernel; classifier lanes padded to 128 inside, sliced here.
    first_tok = x[:, 0, :]                                              # [B, H] bf16
    logp = pallas_pooler_head(first_tok, prepared["pool_w"], prepared["pool_b"],
                              prepared["fc_w_pad"], prepared["fc_b_pad"])
    return logp[:, :cfg["classes"]]                                     # [B, classes]


# ----------------------------------------------------------------------------
# main
# ----------------------------------------------------------------------------

if __name__ == "__main__":
    key = jax.random.PRNGKey(0)
    k_param, k_ids, k_types = jax.random.split(key, 3)

    B, S = 2, 8
    params = init_params(k_param, CFG)
    prepared = prepare_params(params, CFG)

    input_ids = jax.random.randint(k_ids, (B, S), 0, CFG["vocab_size"], dtype=jnp.int32)
    attention_mask = jnp.ones((B, S), dtype=jnp.int32).at[1, 6:].set(0)  # ragged mask
    token_type_ids = jnp.zeros((B, S), dtype=jnp.int32)

    forward = jax.jit(lambda p, ids, am, tt: bert_forward(p, ids, am, tt, CFG))
    out = forward(prepared, input_ids, attention_mask, token_type_ids)
    out = jax.block_until_ready(out)

    assert out.shape == (B, CFG["classes"])
    # log_softmax rows should sum to ~1 after exp
    assert bool(jnp.allclose(jnp.sum(jnp.exp(out), axis=1), 1.0, atol=1e-3))
    print("KERNEL_OK")
</pallas_src>

<mosaic_0001>
module attributes {stable_mosaic.version = 11 : i64} {
  func.func @_layernorm_kernel(%arg0: i32, %arg1: memref<16x32xf32, #tpu.memory_space<vmem>>, %arg2: memref<1x32xf32, #tpu.memory_space<vmem>>, %arg3: memref<1x32xf32, #tpu.memory_space<vmem>>, %arg4: memref<16x32xbf16, #tpu.memory_space<vmem>>) attributes {dimension_semantics = [#tpu.dimension_semantics<parallel>], iteration_bounds = array<i64: 1>, scalar_prefetch = 0 : i64, scratch_operands = 0 : i64, tpu.core_type = #tpu.core_type<tc>, window_params = [{transform_indices = @transform_0, window_bounds = array<i64: 16, 32>}, {pipeline_mode = #tpu.pipeline_mode<synchronous>, transform_indices = @transform_1, window_bounds = array<i64: 1, 32>}, {pipeline_mode = #tpu.pipeline_mode<synchronous>, transform_indices = @transform_2, window_bounds = array<i64: 1, 32>}, {transform_indices = @transform_3, window_bounds = array<i64: 16, 32>}]} {
    %c0 = arith.constant 0 : index
    %c0_0 = arith.constant 0 : index
    %0 = vector.load %arg1[%c0, %c0_0] : memref<16x32xf32, #tpu.memory_space<vmem>>, vector<16x32xf32>
    %c0_1 = arith.constant 0 : index
    %c0_2 = arith.constant 0 : index
    %1 = vector.load %arg2[%c0_1, %c0_2] : memref<1x32xf32, #tpu.memory_space<vmem>>, vector<1x32xf32>
    %c0_3 = arith.constant 0 : index
    %c0_4 = arith.constant 0 : index
    %2 = vector.load %arg3[%c0_3, %c0_4] : memref<1x32xf32, #tpu.memory_space<vmem>>, vector<1x32xf32>
    %cst = arith.constant dense<0.000000e+00> : vector<16xf32>
    %3 = vector.multi_reduction <add>, %0, %cst [1] : vector<16x32xf32> to vector<16xf32>
    %4 = vector.shape_cast %3 : vector<16xf32> to vector<16x1xf32>
    %cst_5 = arith.constant 3.200000e+01 : f32
    %5 = vector.broadcast %cst_5 : f32 to vector<16x1xf32>
    %6 = arith.divf %4, %5 : vector<16x1xf32>
    %7 = vector.broadcast %6 : vector<16x1xf32> to vector<16x32xf32>
    %8 = arith.subf %0, %7 : vector<16x32xf32>
    %9 = arith.mulf %8, %8 : vector<16x32xf32>
    %cst_6 = arith.constant dense<0.000000e+00> : vector<16xf32>
    %10 = vector.multi_reduction <add>, %9, %cst_6 [1] : vector<16x32xf32> to vector<16xf32>
    %11 = vector.shape_cast %10 : vector<16xf32> to vector<16x1xf32>
    %cst_7 = arith.constant 3.200000e+01 : f32
    %12 = vector.broadcast %cst_7 : f32 to vector<16x1xf32>
    %13 = arith.divf %11, %12 : vector<16x1xf32>
    %14 = vector.broadcast %6 : vector<16x1xf32> to vector<16x32xf32>
    %15 = arith.subf %0, %14 : vector<16x32xf32>
    %cst_8 = arith.constant 9.99999996E-13 : f32
    %16 = vector.broadcast %cst_8 : f32 to vector<16x1xf32>
    %17 = arith.addf %13, %16 : vector<16x1xf32>
    %18 = math.rsqrt %17 : vector<16x1xf32>
    %19 = vector.broadcast %18 : vector<16x1xf32> to vector<16x32xf32>
    %20 = arith.mulf %15, %19 : vector<16x32xf32>
    %21 = vector.broadcast %1 : vector<1x32xf32> to vector<16x32xf32>
    %22 = arith.mulf %20, %21 : vector<16x32xf32>
    %23 = vector.broadcast %2 : vector<1x32xf32> to vector<16x32xf32>
    %24 = arith.addf %22, %23 : vector<16x32xf32>
    %25 = arith.truncf %24 : vector<16x32xf32> to vector<16x32xbf16>
    %c0_9 = arith.constant 0 : index
    %c0_10 = arith.constant 0 : index
    %26 = vector.load %arg4[%c0_9, %c0_10] : memref<16x32xbf16, #tpu.memory_space<vmem>>, vector<16x32xbf16>
    tpu.vector_store %arg4[%c0_9, %c0_10], %25 {strides = array<i32>} : memref<16x32xbf16, #tpu.memory_space<vmem>>, vector<16x32xbf16>,
    return
  }
  func.func @transform_0(%arg0: i32) -> (i32, i32) {
    %c0_i32 = arith.constant 0 : i32
    %c0_i32_0 = arith.constant 0 : i32
    return %arg0, %c0_i32 : i32, i32
  }
  func.func @transform_1(%arg0: i32) -> (i32, i32) {
    %c0_i32 = arith.constant 0 : i32
    %c0_i32_0 = arith.constant 0 : i32
    %c0_i32_1 = arith.constant 0 : i32
    return %c0_i32, %c0_i32_0 : i32, i32
  }
  func.func @transform_2(%arg0: i32) -> (i32, i32) {
    %c0_i32 = arith.constant 0 : i32
    %c0_i32_0 = arith.constant 0 : i32
    %c0_i32_1 = arith.constant 0 : i32
    return %c0_i32, %c0_i32_0 : i32, i32
  }
  func.func @transform_3(%arg0: i32) -> (i32, i32) {
    %c0_i32 = arith.constant 0 : i32
    %c0_i32_0 = arith.constant 0 : i32
    return %arg0, %c0_i32 : i32, i32
  }
}

module attributes {stable_mosaic.version = 11 : i64} {
  func.func @_pooler_head_kernel(%arg0: i32, %arg1: memref<2x32xbf16, #tpu.memory_space<vmem>>, %arg2: memref<32x32xbf16, #tpu.memory_space<vmem>>, %arg3: memref<1x32xf32, #tpu.memory_space<vmem>>, %arg4: memref<32x128xbf16, #tpu.memory_space<vmem>>, %arg5: memref<1x128xf32, #tpu.memory_space<vmem>>, %arg6: memref<2x128xf32, #tpu.memory_space<vmem>>) attributes {dimension_semantics = [#tpu.dimension_semantics<arbitrary>], iteration_bounds = array<i64: 1>, scalar_prefetch = 0 : i64, scratch_operands = 0 : i64, tpu.core_type = #tpu.core_type<tc>, window_params = [{pipeline_mode = #tpu.pipeline_mode<synchronous>, transform_indices = @transform_0, window_bounds = array<i64: 2, 32>}, {pipeline_mode = #tpu.pipeline_mode<synchronous>, transform_indices = @transform_1, window_bounds = array<i64: 32, 32>}, {pipeline_mode = #tpu.pipeline_mode<synchronous>, transform_indices = @transform_2, window_bounds = array<i64: 1, 32>}, {pipeline_mode = #tpu.pipeline_mode<synchronous>, transform_indices = @transform_3, window_bounds = array<i64: 32, 128>}, {pipeline_mode = #tpu.pipeline_mode<synchronous>, transform_indices = @transform_4, window_bounds = array<i64: 1, 128>}, {pipeline_mode = #tpu.pipeline_mode<synchronous>, transform_indices = @transform_5, window_bounds = array<i64: 2, 128>}]} {
    %c0 = arith.constant 0 : index
    %c0_0 = arith.constant 0 : index
    %0 = vector.load %arg1[%c0, %c0_0] : memref<2x32xbf16, #tpu.memory_space<vmem>>, vector<2x32xbf16>
    %c0_1 = arith.constant 0 : index
    %c0_2 = arith.constant 0 : index
    %1 = vector.load %arg2[%c0_1, %c0_2] : memref<32x32xbf16, #tpu.memory_space<vmem>>, vector<32x32xbf16>
    %cst = arith.constant dense<0.000000e+00> : vector<2x32xf32>
    %2 = tpu.matmul %0, %1, %cst {dimension_numbers = #tpu.dot_dimension_numbers<[1], [0], [0], [1], [0, 0, 1, 1], [], []>} : vector<2x32xbf16>, vector<32x32xbf16>, vector<2x32xf32> -> vector<2x32xf32>
    %c0_3 = arith.constant 0 : index
    %c0_4 = arith.constant 0 : index
    %3 = vector.load %arg3[%c0_3, %c0_4] : memref<1x32xf32, #tpu.memory_space<vmem>>, vector<1x32xf32>
    %4 = vector.broadcast %3 : vector<1x32xf32> to vector<2x32xf32>
    %5 = arith.addf %2, %4 : vector<2x32xf32>
    %6 = math.tanh %5 : vector<2x32xf32>
    %7 = arith.truncf %6 : vector<2x32xf32> to vector<2x32xbf16>
    %c0_5 = arith.constant 0 : index
    %c0_6 = arith.constant 0 : index
    %8 = vector.load %arg4[%c0_5, %c0_6] : memref<32x128xbf16, #tpu.memory_space<vmem>>, vector<32x128xbf16>
    %cst_7 = arith.constant dense<0.000000e+00> : vector<2x128xf32>
    %9 = tpu.matmul %7, %8, %cst_7 {dimension_numbers = #tpu.dot_dimension_numbers<[1], [0], [0], [1], [0, 0, 1, 1], [], []>} : vector<2x32xbf16>, vector<32x128xbf16>, vector<2x128xf32> -> vector<2x128xf32>
    %c0_8 = arith.constant 0 : index
    %c0_9 = arith.constant 0 : index
    %10 = vector.load %arg5[%c0_8, %c0_9] : memref<1x128xf32, #tpu.memory_space<vmem>>, vector<1x128xf32>
    %11 = vector.broadcast %10 : vector<1x128xf32> to vector<2x128xf32>
    %12 = arith.addf %9, %11 : vector<2x128xf32>
    %cst_10 = arith.constant dense<0xFF800000> : vector<2xf32>
    %13 = vector.multi_reduction <maximumf>, %12, %cst_10 [1] : vector<2x128xf32> to vector<2xf32>
    %14 = vector.shape_cast %13 : vector<2xf32> to vector<2x1xf32>
    %15 = vector.broadcast %14 : vector<2x1xf32> to vector<2x128xf32>
    %16 = arith.subf %12, %15 : vector<2x128xf32>
    %17 = math.exp %16 : vector<2x128xf32>
    %cst_11 = arith.constant dense<0.000000e+00> : vector<2xf32>
    %18 = vector.multi_reduction <add>, %17, %cst_11 [1] : vector<2x128xf32> to vector<2xf32>
    %19 = vector.shape_cast %18 : vector<2xf32> to vector<2x1xf32>
    %20 = math.log %19 : vector<2x1xf32>
    %21 = vector.broadcast %20 : vector<2x1xf32> to vector<2x128xf32>
    %22 = arith.subf %16, %21 : vector<2x128xf32>
    %c0_12 = arith.constant 0 : index
    %c0_13 = arith.constant 0 : index
    %23 = vector.load %arg6[%c0_12, %c0_13] : memref<2x128xf32, #tpu.memory_space<vmem>>, vector<2x128xf32>
    tpu.vector_store %arg6[%c0_12, %c0_13], %22 {strides = array<i32>} : memref<2x128xf32, #tpu.memory_space<vmem>>, vector<2x128xf32>,
    return
  }
  func.func @transform_0(%arg0: i32) -> (i32, i32) {
    %c0_i32 = arith.constant 0 : i32
    %c0_i32_0 = arith.constant 0 : i32
    %c0_i32_1 = arith.constant 0 : i32
    return %c0_i32, %c0_i32_0 : i32, i32
  }
  func.func @transform_1(%arg0: i32) -> (i32, i32) {
    %c0_i32 = arith.constant 0 : i32
    %c0_i32_0 = arith.constant 0 : i32
    %c0_i32_1 = arith.constant 0 : i32
    return %c0_i32, %c0_i32_0 : i32, i32
  }
  func.func @transform_2(%arg0: i32) -> (i32, i32) {
    %c0_i32 = arith.constant 0 : i32
    %c0_i32_0 = arith.constant 0 : i32
    %c0_i32_1 = arith.constant 0 : i32
    return %c0_i32, %c0_i32_0 : i32, i32
  }
  func.func @transform_3(%arg0: i32) -> (i32, i32) {
    %c0_i32 = arith.constant 0 : i32
    %c0_i32_0 = arith.constant 0 : i32
    %c0_i32_1 = arith.constant 0 : i32
    return %c0_i32, %c0_i32_0 : i32, i32
  }
  func.func @transform_4(%arg0: i32) -> (i32, i32) {
    %c0_i32 = arith.constant 0 : i32
    %c0_i32_0 = arith.constant 0 : i32
    %c0_i32_1 = arith.constant 0 : i32
    return %c0_i32, %c0_i32_0 : i32, i32
  }
  func.func @transform_5(%arg0: i32) -> (i32, i32) {
    %c0_i32 = arith.constant 0 : i32
    %c0_i32_0 = arith.constant 0 : i32
    %c0_i32_1 = arith.constant 0 : i32
    return %c0_i32, %c0_i32_0 : i32, i32
  }
}

module attributes {stable_mosaic.version = 11 : i64} {
  func.func @_encoder_layer_kernel(%arg0: i32, %arg1: memref<1x8x32xbf16, #tpu.memory_space<vmem>>, %arg2: memref<1x1x8xf32, #tpu.memory_space<vmem>>, %arg3: memref<32x96xbf16, #tpu.memory_space<vmem>>, %arg4: memref<1x96xf32, #tpu.memory_space<vmem>>, %arg5: memref<32x32xbf16, #tpu.memory_space<vmem>>, %arg6: memref<1x32xf32, #tpu.memory_space<vmem>>, %arg7: memref<1x32xf32, #tpu.memory_space<vmem>>, %arg8: memref<1x32xf32, #tpu.memory_space<vmem>>, %arg9: memref<32x64xbf16, #tpu.memory_space<vmem>>, %arg10: memref<1x64xf32, #tpu.memory_space<vmem>>, %arg11: memref<64x32xbf16, #tpu.memory_space<vmem>>, %arg12: memref<1x32xf32, #tpu.memory_space<vmem>>, %arg13: memref<1x32xf32, #tpu.memory_space<vmem>>, %arg14: memref<1x32xf32, #tpu.memory_space<vmem>>, %arg15: memref<1x8x32xbf16, #tpu.memory_space<vmem>>, %arg16: memref<8x32xf32, #tpu.memory_space<vmem>>) attributes {dimension_semantics = [#tpu.dimension_semantics<parallel>], iteration_bounds = array<i64: 2>, scalar_prefetch = 0 : i64, scratch_operands = 1 : i64, tpu.core_type = #tpu.core_type<tc>, window_params = [{transform_indices = @transform_0, window_bounds = array<i64: 1, 8, 32>}, {transform_indices = @transform_1, window_bounds = array<i64: 1, 1, 8>}, {pipeline_mode = #tpu.pipeline_mode<synchronous>, transform_indices = @transform_2, window_bounds = array<i64: 32, 96>}, {pipeline_mode = #tpu.pipeline_mode<synchronous>, transform_indices = @transform_3, window_bounds = array<i64: 1, 96>}, {pipeline_mode = #tpu.pipeline_mode<synchronous>, transform_indices = @transform_4, window_bounds = array<i64: 32, 32>}, {pipeline_mode = #tpu.pipeline_mode<synchronous>, transform_indices = @transform_5, window_bounds = array<i64: 1, 32>}, {pipeline_mode = #tpu.pipeline_mode<synchronous>, transform_indices = @transform_6, window_bounds = array<i64: 1, 32>}, {pipeline_mode = #tpu.pipeline_mode<synchronous>, transform_indices = @transform_7, window_bounds = array<i64: 1, 32>}, {pipeline_mode = #tpu.pipeline_mode<synchronous>, transform_indices = @transform_8, window_bounds = array<i64: 32, 64>}, {pipeline_mode = #tpu.pipeline_mode<synchronous>, transform_indices = @transform_9, window_bounds = array<i64: 1, 64>}, {pipeline_mode = #tpu.pipeline_mode<synchronous>, transform_indices = @transform_10, window_bounds = array<i64: 64, 32>}, {pipeline_mode = #tpu.pipeline_mode<synchronous>, transform_indices = @transform_11, window_bounds = array<i64: 1, 32>}, {pipeline_mode = #tpu.pipeline_mode<synchronous>, transform_indices = @transform_12, window_bounds = array<i64: 1, 32>}, {pipeline_mode = #tpu.pipeline_mode<synchronous>, transform_indices = @transform_13, window_bounds = array<i64: 1, 32>}, {transform_indices = @transform_14, window_bounds = array<i64: 1, 8, 32>}]} {
    %c0 = arith.constant 0 : index
    %c0_0 = arith.constant 0 : index
    %c0_1 = arith.constant 0 : index
    %0 = vector.load %arg1[%c0, %c0_0, %c0_1] : memref<1x8x32xbf16, #tpu.memory_space<vmem>>, vector<1x8x32xbf16>
    %1 = vector.shape_cast %0 : vector<1x8x32xbf16> to vector<8x32xbf16>
    %2 = arith.extf %1 : vector<8x32xbf16> to vector<8x32xf32>
    %c0_2 = arith.constant 0 : index
    %c0_3 = arith.constant 0 : index
    %c0_4 = arith.constant 0 : index
    %3 = vector.load %arg2[%c0_2, %c0_3, %c0_4] : memref<1x1x8xf32, #tpu.memory_space<vmem>>, vector<1x1x8xf32>
    %4 = vector.shape_cast %3 : vector<1x1x8xf32> to vector<1x8xf32>
    %c0_5 = arith.constant 0 : index
    %c0_6 = arith.constant 0 : index
    %5 = vector.load %arg3[%c0_5, %c0_6] : memref<32x96xbf16, #tpu.memory_space<vmem>>, vector<32x96xbf16>
    %cst = arith.constant dense<0.000000e+00> : vector<8x96xf32>
    %6 = tpu.matmul %1, %5, %cst {dimension_numbers = #tpu.dot_dimension_numbers<[1], [0], [0], [1], [0, 0, 1, 1], [], []>} : vector<8x32xbf16>, vector<32x96xbf16>, vector<8x96xf32> -> vector<8x96xf32>
    %c0_7 = arith.constant 0 : index
    %c0_8 = arith.constant 0 : index
    %7 = vector.load %arg4[%c0_7, %c0_8] : memref<1x96xf32, #tpu.memory_space<vmem>>, vector<1x96xf32>
    %8 = vector.broadcast %7 : vector<1x96xf32> to vector<8x96xf32>
    %9 = arith.addf %6, %8 : vector<8x96xf32>
    %10 = vector.extract_strided_slice %9 {offsets = [0, 0], sizes = [8, 8], strides = [1, 1]} : vector<8x96xf32> to vector<8x8xf32>
    %11 = vector.extract_strided_slice %9 {offsets = [0, 32], sizes = [8, 8], strides = [1, 1]} : vector<8x96xf32> to vector<8x8xf32>
    %12 = vector.extract_strided_slice %9 {offsets = [0, 64], sizes = [8, 8], strides = [1, 1]} : vector<8x96xf32> to vector<8x8xf32>
    %cst_9 = arith.constant dense<0.000000e+00> : vector<8x8xf32>
    %13 = tpu.matmul %10, %11, %cst_9 {dimension_numbers = #tpu.dot_dimension_numbers<[1], [1], [0], [0], [0, 0, 1, 0], [], []>} : vector<8x8xf32>, vector<8x8xf32>, vector<8x8xf32> -> vector<8x8xf32>
    %14 = vector.broadcast %4 : vector<1x8xf32> to vector<8x8xf32>
    %15 = arith.addf %13, %14 : vector<8x8xf32>
    %cst_10 = arith.constant dense<0xFF800000> : vector<8xf32>
    %16 = vector.multi_reduction <maximumf>, %15, %cst_10 [1] : vector<8x8xf32> to vector<8xf32>
    %17 = vector.shape_cast %16 : vector<8xf32> to vector<8x1xf32>
    %18 = vector.broadcast %17 : vector<8x1xf32> to vector<8x8xf32>
    %19 = arith.subf %15, %18 : vector<8x8xf32>
    %20 = math.exp %19 : vector<8x8xf32>
    %cst_11 = arith.constant dense<0.000000e+00> : vector<8xf32>
    %21 = vector.multi_reduction <add>, %20, %cst_11 [1] : vector<8x8xf32> to vector<8xf32>
    %22 = vector.shape_cast %21 : vector<8xf32> to vector<8x1xf32>
    %23 = tpu.reciprocal %22 {approx = true} : vector<8x1xf32> -> vector<8x1xf32>
    %24 = vector.broadcast %23 : vector<8x1xf32> to vector<8x8xf32>
    %25 = arith.mulf %20, %24 : vector<8x8xf32>
    %26 = arith.truncf %25 : vector<8x8xf32> to vector<8x8xbf16>
    %27 = arith.truncf %12 : vector<8x8xf32> to vector<8x8xbf16>
    %cst_12 = arith.constant dense<0.000000e+00> : vector<8x8xf32>
    %28 = tpu.matmul %26, %27, %cst_12 {dimension_numbers = #tpu.dot_dimension_numbers<[1], [0], [0], [1], [0, 0, 1, 1], [], []>} : vector<8x8xbf16>, vector<8x8xbf16>, vector<8x8xf32> -> vector<8x8xf32>
    %c0_13 = arith.constant 0 : index
    %c0_14 = arith.constant 0 : index
    %29 = vector.load %arg16[%c0_13, %c0_14] : memref<8x32xf32, #tpu.memory_space<vmem>>, vector<8x8xf32>
    tpu.vector_store %arg16[%c0_13, %c0_14], %28 {strides = array<i32>} : memref<8x32xf32, #tpu.memory_space<vmem>>, vector<8x8xf32>,
    %30 = vector.extract_strided_slice %9 {offsets = [0, 8], sizes = [8, 8], strides = [1, 1]} : vector<8x96xf32> to vector<8x8xf32>
    %31 = vector.extract_strided_slice %9 {offsets = [0, 40], sizes = [8, 8], strides = [1, 1]} : vector<8x96xf32> to vector<8x8xf32>
    %32 = vector.extract_strided_slice %9 {offsets = [0, 72], sizes = [8, 8], strides = [1, 1]} : vector<8x96xf32> to vector<8x8xf32>
    %cst_15 = arith.constant dense<0.000000e+00> : vector<8x8xf32>
    %33 = tpu.matmul %30, %31, %cst_15 {dimension_numbers = #tpu.dot_dimension_numbers<[1], [1], [0], [0], [0, 0, 1, 0], [], []>} : vector<8x8xf32>, vector<8x8xf32>, vector<8x8xf32> -> vector<8x8xf32>
    %34 = vector.broadcast %4 : vector<1x8xf32> to vector<8x8xf32>
    %35 = arith.addf %33, %34 : vector<8x8xf32>
    %cst_16 = arith.constant dense<0xFF800000> : vector<8xf32>
    %36 = vector.multi_reduction <maximumf>, %35, %cst_16 [1] : vector<8x8xf32> to vector<8xf32>
    %37 = vector.shape_cast %36 : vector<8xf32> to vector<8x1xf32>
    %38 = vector.broadcast %37 : vector<8x1xf32> to vector<8x8xf32>
    %39 = arith.subf %35, %38 : vector<8x8xf32>
    %40 = math.exp %39 : vector<8x8xf32>
    %cst_17 = arith.constant dense<0.000000e+00> : vector<8xf32>
    %41 = vector.multi_reduction <add>, %40, %cst_17 [1] : vector<8x8xf32> to vector<8xf32>
    %42 = vector.shape_cast %41 : vector<8xf32> to vector<8x1xf32>
    %43 = tpu.reciprocal %42 {approx = true} : vector<8x1xf32> -> vector<8x1xf32>
    %44 = vector.broadcast %43 : vector<8x1xf32> to vector<8x8xf32>
    %45 = arith.mulf %40, %44 : vector<8x8xf32>
    %46 = arith.truncf %45 : vector<8x8xf32> to vector<8x8xbf16>
    %47 = arith.truncf %32 : vector<8x8xf32> to vector<8x8xbf16>
    %cst_18 = arith.constant dense<0.000000e+00> : vector<8x8xf32>
    %48 = tpu.matmul %46, %47, %cst_18 {dimension_numbers = #tpu.dot_dimension_numbers<[1], [0], [0], [1], [0, 0, 1, 1], [], []>} : vector<8x8xbf16>, vector<8x8xbf16>, vector<8x8xf32> -> vector<8x8xf32>
    %c0_19 = arith.constant 0 : index
    %c8 = arith.constant 8 : index
    %49 = vector.load %arg16[%c0_19, %c8] : memref<8x32xf32, #tpu.memory_space<vmem>>, vector<8x8xf32>
    tpu.vector_store %arg16[%c0_19, %c8], %48 {strides = array<i32>} : memref<8x32xf32, #tpu.memory_space<vmem>>, vector<8x8xf32>,
    %50 = vector.extract_strided_slice %9 {offsets = [0, 16], sizes = [8, 8], strides = [1, 1]} : vector<8x96xf32> to vector<8x8xf32>
    %51 = vector.extract_strided_slice %9 {offsets = [0, 48], sizes = [8, 8], strides = [1, 1]} : vector<8x96xf32> to vector<8x8xf32>
    %52 = vector.extract_strided_slice %9 {offsets = [0, 80], sizes = [8, 8], strides = [1, 1]} : vector<8x96xf32> to vector<8x8xf32>
    %cst_20 = arith.constant dense<0.000000e+00> : vector<8x8xf32>
    %53 = tpu.matmul %50, %51, %cst_20 {dimension_numbers = #tpu.dot_dimension_numbers<[1], [1], [0], [0], [0, 0, 1, 0], [], []>} : vector<8x8xf32>, vector<8x8xf32>, vector<8x8xf32> -> vector<8x8xf32>
    %54 = vector.broadcast %4 : vector<1x8xf32> to vector<8x8xf32>
    %55 = arith.addf %53, %54 : vector<8x8xf32>
    %cst_21 = arith.constant dense<0xFF800000> : vector<8xf32>
    %56 = vector.multi_reduction <maximumf>, %55, %cst_21 [1] : vector<8x8xf32> to vector<8xf32>
    %57 = vector.shape_cast %56 : vector<8xf32> to vector<8x1xf32>
    %58 = vector.broadcast %57 : vector<8x1xf32> to vector<8x8xf32>
    %59 = arith.subf %55, %58 : vector<8x8xf32>
    %60 = math.exp %59 : vector<8x8xf32>
    %cst_22 = arith.constant dense<0.000000e+00> : vector<8xf32>
    %61 = vector.multi_reduction <add>, %60, %cst_22 [1] : vector<8x8xf32> to vector<8xf32>
    %62 = vector.shape_cast %61 : vector<8xf32> to vector<8x1xf32>
    %63 = tpu.reciprocal %62 {approx = true} : vector<8x1xf32> -> vector<8x1xf32>
    %64 = vector.broadcast %63 : vector<8x1xf32> to vector<8x8xf32>
    %65 = arith.mulf %60, %64 : vector<8x8xf32>
    %66 = arith.truncf %65 : vector<8x8xf32> to vector<8x8xbf16>
    %67 = arith.truncf %52 : vector<8x8xf32> to vector<8x8xbf16>
    %cst_23 = arith.constant dense<0.000000e+00> : vector<8x8xf32>
    %68 = tpu.matmul %66, %67, %cst_23 {dimension_numbers = #tpu.dot_dimension_numbers<[1], [0], [0], [1], [0, 0, 1, 1], [], []>} : vector<8x8xbf16>, vector<8x8xbf16>, vector<8x8xf32> -> vector<8x8xf32>
    %c0_24 = arith.constant 0 : index
    %c16 = arith.constant 16 : index
    %69 = vector.load %arg16[%c0_24, %c16] : memref<8x32xf32, #tpu.memory_space<vmem>>, vector<8x8xf32>
    tpu.vector_store %arg16[%c0_24, %c16], %68 {strides = array<i32>} : memref<8x32xf32, #tpu.memory_space<vmem>>, vector<8x8xf32>,
    %70 = vector.extract_strided_slice %9 {offsets = [0, 24], sizes = [8, 8], strides = [1, 1]} : vector<8x96xf32> to vector<8x8xf32>
    %71 = vector.extract_strided_slice %9 {offsets = [0, 56], sizes = [8, 8], strides = [1, 1]} : vector<8x96xf32> to vector<8x8xf32>
    %72 = vector.extract_strided_slice %9 {offsets = [0, 88], sizes = [8, 8], strides = [1, 1]} : vector<8x96xf32> to vector<8x8xf32>
    %cst_25 = arith.constant dense<0.000000e+00> : vector<8x8xf32>
    %73 = tpu.matmul %70, %71, %cst_25 {dimension_numbers = #tpu.dot_dimension_numbers<[1], [1], [0], [0], [0, 0, 1, 0], [], []>} : vector<8x8xf32>, vector<8x8xf32>, vector<8x8xf32> -> vector<8x8xf32>
    %74 = vector.broadcast %4 : vector<1x8xf32> to vector<8x8xf32>
    %75 = arith.addf %73, %74 : vector<8x8xf32>
    %cst_26 = arith.constant dense<0xFF800000> : vector<8xf32>
    %76 = vector.multi_reduction <maximumf>, %75, %cst_26 [1] : vector<8x8xf32> to vector<8xf32>
    %77 = vector.shape_cast %76 : vector<8xf32> to vector<8x1xf32>
    %78 = vector.broadcast %77 : vector<8x1xf32> to vector<8x8xf32>
    %79 = arith.subf %75, %78 : vector<8x8xf32>
    %80 = math.exp %79 : vector<8x8xf32>
    %cst_27 = arith.constant dense<0.000000e+00> : vector<8xf32>
    %81 = vector.multi_reduction <add>, %80, %cst_27 [1] : vector<8x8xf32> to vector<8xf32>
    %82 = vector.shape_cast %81 : vector<8xf32> to vector<8x1xf32>
    %83 = tpu.reciprocal %82 {approx = true} : vector<8x1xf32> -> vector<8x1xf32>
    %84 = vector.broadcast %83 : vector<8x1xf32> to vector<8x8xf32>
    %85 = arith.mulf %80, %84 : vector<8x8xf32>
    %86 = arith.truncf %85 : vector<8x8xf32> to vector<8x8xbf16>
    %87 = arith.truncf %72 : vector<8x8xf32> to vector<8x8xbf16>
    %cst_28 = arith.constant dense<0.000000e+00> : vector<8x8xf32>
    %88 = tpu.matmul %86, %87, %cst_28 {dimension_numbers = #tpu.dot_dimension_numbers<[1], [0], [0], [1], [0, 0, 1, 1], [], []>} : vector<8x8xbf16>, vector<8x8xbf16>, vector<8x8xf32> -> vector<8x8xf32>
    %c0_29 = arith.constant 0 : index
    %c24 = arith.constant 24 : index
    %89 = vector.load %arg16[%c0_29, %c24] : memref<8x32xf32, #tpu.memory_space<vmem>>, vector<8x8xf32>
    tpu.vector_store %arg16[%c0_29, %c24], %88 {strides = array<i32>} : memref<8x32xf32, #tpu.memory_space<vmem>>, vector<8x8xf32>,
    %c0_30 = arith.constant 0 : index
    %c0_31 = arith.constant 0 : index
    %90 = vector.load %arg16[%c0_30, %c0_31] : memref<8x32xf32, #tpu.memory_space<vmem>>, vector<8x32xf32>
    %91 = arith.truncf %90 : vector<8x32xf32> to vector<8x32xbf16>
    %c0_32 = arith.constant 0 : index
    %c0_33 = arith.constant 0 : index
    %92 = vector.load %arg5[%c0_32, %c0_33] : memref<32x32xbf16, #tpu.memory_space<vmem>>, vector<32x32xbf16>
    %cst_34 = arith.constant dense<0.000000e+00> : vector<8x32xf32>
    %93 = tpu.matmul %91, %92, %cst_34 {dimension_numbers = #tpu.dot_dimension_numbers<[1], [0], [0], [1], [0, 0, 1, 1], [], []>} : vector<8x32xbf16>, vector<32x32xbf16>, vector<8x32xf32> -> vector<8x32xf32>
    %c0_35 = arith.constant 0 : index
    %c0_36 = arith.constant 0 : index
    %94 = vector.load %arg6[%c0_35, %c0_36] : memref<1x32xf32, #tpu.memory_space<vmem>>, vector<1x32xf32>
    %95 = vector.broadcast %94 : vector<1x32xf32> to vector<8x32xf32>
    %96 = arith.addf %93, %95 : vector<8x32xf32>
    %97 = arith.addf %2, %96 : vector<8x32xf32>
    %c0_37 = arith.constant 0 : index
    %c0_38 = arith.constant 0 : index
    %98 = vector.load %arg7[%c0_37, %c0_38] : memref<1x32xf32, #tpu.memory_space<vmem>>, vector<1x32xf32>
    %c0_39 = arith.constant 0 : index
    %c0_40 = arith.constant 0 : index
    %99 = vector.load %arg8[%c0_39, %c0_40] : memref<1x32xf32, #tpu.memory_space<vmem>>, vector<1x32xf32>
    %cst_41 = arith.constant dense<0.000000e+00> : vector<8xf32>
    %100 = vector.multi_reduction <add>, %97, %cst_41 [1] : vector<8x32xf32> to vector<8xf32>
    %101 = vector.shape_cast %100 : vector<8xf32> to vector<8x1xf32>
    %cst_42 = arith.constant 3.200000e+01 : f32
    %102 = vector.broadcast %cst_42 : f32 to vector<8x1xf32>
    %103 = arith.divf %101, %102 : vector<8x1xf32>
    %104 = vector.broadcast %103 : vector<8x1xf32> to vector<8x32xf32>
    %105 = arith.subf %97, %104 : vector<8x32xf32>
    %106 = arith.mulf %105, %105 : vector<8x32xf32>
    %cst_43 = arith.constant dense<0.000000e+00> : vector<8xf32>
    %107 = vector.multi_reduction <add>, %106, %cst_43 [1] : vector<8x32xf32> to vector<8xf32>
    %108 = vector.shape_cast %107 : vector<8xf32> to vector<8x1xf32>
    %cst_44 = arith.constant 3.200000e+01 : f32
    %109 = vector.broadcast %cst_44 : f32 to vector<8x1xf32>
    %110 = arith.divf %108, %109 : vector<8x1xf32>
    %111 = vector.broadcast %103 : vector<8x1xf32> to vector<8x32xf32>
    %112 = arith.subf %97, %111 : vector<8x32xf32>
    %cst_45 = arith.constant 9.99999996E-13 : f32
    %113 = vector.broadcast %cst_45 : f32 to vector<8x1xf32>
    %114 = arith.addf %110, %113 : vector<8x1xf32>
    %115 = math.rsqrt %114 : vector<8x1xf32>
    %116 = vector.broadcast %115 : vector<8x1xf32> to vector<8x32xf32>
    %117 = arith.mulf %112, %116 : vector<8x32xf32>
    %118 = vector.broadcast %98 : vector<1x32xf32> to vector<8x32xf32>
    %119 = arith.mulf %117, %118 : vector<8x32xf32>
    %120 = vector.broadcast %99 : vector<1x32xf32> to vector<8x32xf32>
    %121 = arith.addf %119, %120 : vector<8x32xf32>
    %122 = arith.truncf %121 : vector<8x32xf32> to vector<8x32xbf16>
    %c0_46 = arith.constant 0 : index
    %c0_47 = arith.constant 0 : index
    %123 = vector.load %arg9[%c0_46, %c0_47] : memref<32x64xbf16, #tpu.memory_space<vmem>>, vector<32x64xbf16>
    %cst_48 = arith.constant dense<0.000000e+00> : vector<8x64xf32>
    %124 = tpu.matmul %122, %123, %cst_48 {dimension_numbers = #tpu.dot_dimension_numbers<[1], [0], [0], [1], [0, 0, 1, 1], [], []>} : vector<8x32xbf16>, vector<32x64xbf16>, vector<8x64xf32> -> vector<8x64xf32>
    %c0_49 = arith.constant 0 : index
    %c0_50 = arith.constant 0 : index
    %125 = vector.load %arg10[%c0_49, %c0_50] : memref<1x64xf32, #tpu.memory_space<vmem>>, vector<1x64xf32>
    %126 = vector.broadcast %125 : vector<1x64xf32> to vector<8x64xf32>
    %127 = arith.addf %124, %126 : vector<8x64xf32>
    %cst_51 = arith.constant 5.000000e-01 : f32
    %128 = vector.broadcast %cst_51 : f32 to vector<8x64xf32>
    %129 = arith.mulf %128, %127 : vector<8x64xf32>
    %cst_52 = arith.constant 0.707106769 : f32
    %130 = vector.broadcast %cst_52 : f32 to vector<8x64xf32>
    %131 = arith.mulf %127, %130 : vector<8x64xf32>
    %132 = math.erf %131 : vector<8x64xf32>
    %cst_53 = arith.constant 1.000000e+00 : f32
    %133 = vector.broadcast %cst_53 : f32 to vector<8x64xf32>
    %134 = arith.addf %133, %132 : vector<8x64xf32>
    %135 = arith.mulf %129, %134 : vector<8x64xf32>
    %136 = arith.truncf %135 : vector<8x64xf32> to vector<8x64xbf16>
    %c0_54 = arith.constant 0 : index
    %c0_55 = arith.constant 0 : index
    %137 = vector.load %arg11[%c0_54, %c0_55] : memref<64x32xbf16, #tpu.memory_space<vmem>>, vector<64x32xbf16>
    %cst_56 = arith.constant dense<0.000000e+00> : vector<8x32xf32>
    %138 = tpu.matmul %136, %137, %cst_56 {dimension_numbers = #tpu.dot_dimension_numbers<[1], [0], [0], [1], [0, 0, 1, 1], [], []>} : vector<8x64xbf16>, vector<64x32xbf16>, vector<8x32xf32> -> vector<8x32xf32>
    %c0_57 = arith.constant 0 : index
    %c0_58 = arith.constant 0 : index
    %139 = vector.load %arg12[%c0_57, %c0_58] : memref<1x32xf32, #tpu.memory_space<vmem>>, vector<1x32xf32>
    %140 = vector.broadcast %139 : vector<1x32xf32> to vector<8x32xf32>
    %141 = arith.addf %138, %140 : vector<8x32xf32>
    %142 = arith.addf %121, %141 : vector<8x32xf32>
    %c0_59 = arith.constant 0 : index
    %c0_60 = arith.constant 0 : index
    %143 = vector.load %arg13[%c0_59, %c0_60] : memref<1x32xf32, #tpu.memory_space<vmem>>, vector<1x32xf32>
    %c0_61 = arith.constant 0 : index
    %c0_62 = arith.constant 0 : index
    %144 = vector.load %arg14[%c0_61, %c0_62] : memref<1x32xf32, #tpu.memory_space<vmem>>, vector<1x32xf32>
    %cst_63 = arith.constant dense<0.000000e+00> : vector<8xf32>
    %145 = vector.multi_reduction <add>, %142, %cst_63 [1] : vector<8x32xf32> to vector<8xf32>
    %146 = vector.shape_cast %145 : vector<8xf32> to vector<8x1xf32>
    %cst_64 = arith.constant 3.200000e+01 : f32
    %147 = vector.broadcast %cst_64 : f32 to vector<8x1xf32>
    %148 = arith.divf %146, %147 : vector<8x1xf32>
    %149 = vector.broadcast %148 : vector<8x1xf32> to vector<8x32xf32>
    %150 = arith.subf %142, %149 : vector<8x32xf32>
    %151 = arith.mulf %150, %150 : vector<8x32xf32>
    %cst_65 = arith.constant dense<0.000000e+00> : vector<8xf32>
    %152 = vector.multi_reduction <add>, %151, %cst_65 [1] : vector<8x32xf32> to vector<8xf32>
    %153 = vector.shape_cast %152 : vector<8xf32> to vector<8x1xf32>
    %cst_66 = arith.constant 3.200000e+01 : f32
    %154 = vector.broadcast %cst_66 : f32 to vector<8x1xf32>
    %155 = arith.divf %153, %154 : vector<8x1xf32>
    %156 = vector.broadcast %148 : vector<8x1xf32> to vector<8x32xf32>
    %157 = arith.subf %142, %156 : vector<8x32xf32>
    %cst_67 = arith.constant 9.99999996E-13 : f32
    %158 = vector.broadcast %cst_67 : f32 to vector<8x1xf32>
    %159 = arith.addf %155, %158 : vector<8x1xf32>
    %160 = math.rsqrt %159 : vector<8x1xf32>
    %161 = vector.broadcast %160 : vector<8x1xf32> to vector<8x32xf32>
    %162 = arith.mulf %157, %161 : vector<8x32xf32>
    %163 = vector.broadcast %143 : vector<1x32xf32> to vector<8x32xf32>
    %164 = arith.mulf %162, %163 : vector<8x32xf32>
    %165 = vector.broadcast %144 : vector<1x32xf32> to vector<8x32xf32>
    %166 = arith.addf %164, %165 : vector<8x32xf32>
    %167 = arith.truncf %166 : vector<8x32xf32> to vector<8x32xbf16>
    %c0_68 = arith.constant 0 : index
    %c0_69 = arith.constant 0 : index
    %c0_70 = arith.constant 0 : index
    %168 = vector.load %arg15[%c0_68, %c0_69, %c0_70] : memref<1x8x32xbf16, #tpu.memory_space<vmem>>, vector<1x8x32xbf16>
    %169 = vector.shape_cast %168 : vector<1x8x32xbf16> to vector<8x32xbf16>
    %170 = vector.shape_cast %167 : vector<8x32xbf16> to vector<1x8x32xbf16>
    tpu.vector_store %arg15[%c0_68, %c0_69, %c0_70], %170 {strides = array<i32>} : memref<1x8x32xbf16, #tpu.memory_space<vmem>>, vector<1x8x32xbf16>,
    return
  }
  func.func @transform_0(%arg0: i32) -> (i32, i32, i32) {
    %c0_i32 = arith.constant 0 : i32
    %c0_i32_0 = arith.constant 0 : i32
    %c0_i32_1 = arith.constant 0 : i32
    return %arg0, %c0_i32, %c0_i32_0 : i32, i32, i32
  }
  func.func @transform_1(%arg0: i32) -> (i32, i32, i32) {
    %c0_i32 = arith.constant 0 : i32
    %c0_i32_0 = arith.constant 0 : i32
    %c0_i32_1 = arith.constant 0 : i32
    return %arg0, %c0_i32, %c0_i32_0 : i32, i32, i32
  }
  func.func @transform_2(%arg0: i32) -> (i32, i32) {
    %c0_i32 = arith.constant 0 : i32
    %c0_i32_0 = arith.constant 0 : i32
    %c0_i32_1 = arith.constant 0 : i32
    return %c0_i32, %c0_i32_0 : i32, i32
  }
  func.func @transform_3(%arg0: i32) -> (i32, i32) {
    %c0_i32 = arith.constant 0 : i32
    %c0_i32_0 = arith.constant 0 : i32
    %c0_i32_1 = arith.constant 0 : i32
    return %c0_i32, %c0_i32_0 : i32, i32
  }
  func.func @transform_4(%arg0: i32) -> (i32, i32) {
    %c0_i32 = arith.constant 0 : i32
    %c0_i32_0 = arith.constant 0 : i32
    %c0_i32_1 = arith.constant 0 : i32
    return %c0_i32, %c0_i32_0 : i32, i32
  }
  func.func @transform_5(%arg0: i32) -> (i32, i32) {
    %c0_i32 = arith.constant 0 : i32
    %c0_i32_0 = arith.constant 0 : i32
    %c0_i32_1 = arith.constant 0 : i32
    return %c0_i32, %c0_i32_0 : i32, i32
  }
  func.func @transform_6(%arg0: i32) -> (i32, i32) {
    %c0_i32 = arith.constant 0 : i32
    %c0_i32_0 = arith.constant 0 : i32
    %c0_i32_1 = arith.constant 0 : i32
    return %c0_i32, %c0_i32_0 : i32, i32
  }
  func.func @transform_7(%arg0: i32) -> (i32, i32) {
    %c0_i32 = arith.constant 0 : i32
    %c0_i32_0 = arith.constant 0 : i32
    %c0_i32_1 = arith.constant 0 : i32
    return %c0_i32, %c0_i32_0 : i32, i32
  }
  func.func @transform_8(%arg0: i32) -> (i32, i32) {
    %c0_i32 = arith.constant 0 : i32
    %c0_i32_0 = arith.constant 0 : i32
    %c0_i32_1 = arith.constant 0 : i32
    return %c0_i32, %c0_i32_0 : i32, i32
  }
  func.func @transform_9(%arg0: i32) -> (i32, i32) {
    %c0_i32 = arith.constant 0 : i32
    %c0_i32_0 = arith.constant 0 : i32
    %c0_i32_1 = arith.constant 0 : i32
    return %c0_i32, %c0_i32_0 : i32, i32
  }
  func.func @transform_10(%arg0: i32) -> (i32, i32) {
    %c0_i32 = arith.constant 0 : i32
    %c0_i32_0 = arith.constant 0 : i32
    %c0_i32_1 = arith.constant 0 : i32
    return %c0_i32, %c0_i32_0 : i32, i32
  }
  func.func @transform_11(%arg0: i32) -> (i32, i32) {
    %c0_i32 = arith.constant 0 : i32
    %c0_i32_0 = arith.constant 0 : i32
    %c0_i32_1 = arith.constant 0 : i32
    return %c0_i32, %c0_i32_0 : i32, i32
  }
  func.func @transform_12(%arg0: i32) -> (i32, i32) {
    %c0_i32 = arith.constant 0 : i32
    %c0_i32_0 = arith.constant 0 : i32
    %c0_i32_1 = arith.constant 0 : i32
    return %c0_i32, %c0_i32_0 : i32, i32
  }
  func.func @transform_13(%arg0: i32) -> (i32, i32) {
    %c0_i32 = arith.constant 0 : i32
    %c0_i32_0 = arith.constant 0 : i32
    %c0_i32_1 = arith.constant 0 : i32
    return %c0_i32, %c0_i32_0 : i32, i32
  }
  func.func @transform_14(%arg0: i32) -> (i32, i32, i32) {
    %c0_i32 = arith.constant 0 : i32
    %c0_i32_0 = arith.constant 0 : i32
    %c0_i32_1 = arith.constant 0 : i32
    return %arg0, %c0_i32, %c0_i32_0 : i32, i32, i32
  }
}

</mosaic_0001>

<llo_original>
// kernel: _lambda_.4
$region0: #{_lambda_.4}
  #allocation0 [shape = 'u32[]', space=smem, size = 0x4, offset = 0x4, fixed_abs, tag = 'smem constant byte address 0x4 - core index']
  #allocation1 [shape = 'u32[144,128]{1,0:T(1,128)}', space=vmem, size = 0x12000, scoped, tag = 'internal scratch']
  %s0 = inlined_call_operand.vmem [shape: f32[16,32], index: 0, kind: input, shape index: {}]
  %s1 = inlined_call_operand.vmem [shape: f32[1,32], index: 1, kind: input, shape index: {}]
  %s2 = inlined_call_operand.vmem [shape: f32[1,32], index: 2, kind: input, shape index: {}]
  %s3 = inlined_call_operand.vmem [shape: bf16[16,32], index: 3, kind: output, shape index: {}]
  %s4 = sld [smem:[#allocation0]]
  $region22: #{_lambda_.4} parent=0
    _
  %s6 = ssub.s32 1, %s4
  %s7 = scalar_select 0, %s6, %s4
  // Predicated region
  $region2: #{_lambda_.4} parent=0 // pred_check
    _
  $region3: #{_lambda_.4} parent=0 // pred_check_branch
    %9 = sbr.rel (0) target = $region5
  $region4: #{_lambda_.4} parent=0 // pred_region
    _
  $region5: #{_lambda_.4} parent=0 // pred_fallthru
    _
  // Predicated region
  $region6: #{_lambda_.4} parent=0 // pred_check
    _
  $region7: #{_lambda_.4} parent=0 // pred_check_branch
    %11 = sbr.rel (0) target = $region9
  $region8: #{_lambda_.4} parent=0 // pred_region
    _
  $region9: #{_lambda_.4} parent=0 // pred_fallthru
    _
  // Predicated region
  $region10: #{_lambda_.4} parent=0 // pred_check
    _
  $region11: #{_lambda_.4} parent=0 // pred_check_branch
    %13 = sbr.rel (0) target = $region13
  $region12: #{_lambda_.4} parent=0 // pred_region
    _
  $region13: #{_lambda_.4} parent=0 // pred_fallthru
    _
  %v14 = vld [vmem:[%s0] sm:$0xff]
  %v15 = vld [vmem:[%s0 + $0x8] sm:$0xff]
  %v16 = vld [vmem:[%s1] sm:$0x1]
  %v17 = vld [vmem:[%s2] sm:$0x1]
  %vm18 = vcmask 261120
  %v19 = vsel %vm18, %v14, 0.0
  %20 = vadd.xlane.f32.xlu0 %v19
  %v21 = vpop.xlane.xlu0 %20
  %v22 = vsel %vm18, %v15, 0.0
  %23 = vadd.xlane.f32.xlu0 %v22
  %v24 = vpop.xlane.xlu0 %23
  %v25 = vrcp.pop 32.0
  %v26 = vmul.f32 %v21, %v25
  %v27 = vmul.f32 %v24, %v25
  %v28 = vsub.f32 %v14, %v26
  %v29 = vsub.f32 %v15, %v27
  %v30 = vmul.f32 %v28, %v28
  %v31 = vmul.f32 %v29, %v29
  %v32 = vsel %vm18, %v30, 0.0
  %33 = vadd.xlane.f32.xlu0 %v32
  %v34 = vpop.xlane.xlu0 %33
  %v35 = vsel %vm18, %v31, 0.0
  %36 = vadd.xlane.f32.xlu0 %v35
  %v37 = vpop.xlane.xlu0 %36
  %v38 = vmul.f32 %v34, %v25
  %v39 = vmul.f32 %v37, %v25
  %v40 = vadd.f32 %v38, 1e-12
  %v41 = vadd.f32 %v39, 1e-12
  %v42 = vrsqrt.pop %v40
  %v43 = vrsqrt.pop %v41
  %v44 = vmul.f32 %v28, %v42
  %v45 = vmul.f32 %v29, %v43
  %v47 = vlaneseq
  %v48 = vshrl.u32 %v47, 7
  %v49 = vsub.s32 0, %v48
  %v50 = vrot.slane %v16, %v49
  %v52 = vmul.f32 %v44, %v50
  %v53 = vmul.f32 %v45, %v50
  %v55 = vlaneseq
  %v56 = vshrl.u32 %v55, 7
  %v57 = vsub.s32 0, %v56
  %v58 = vrot.slane %v17, %v57
  %v60 = vadd.f32 %v52, %v58
  %v61 = vadd.f32 %v53, %v58
  %v62 = vpack.c.bf16 %v61, %v60
  %v64 = vunpack.c.l.b16 %v62
  %v65 = vunpack.c.h.b16 %v62
  %v66 = vpack.c.b16 %v64, %v64
  %v67 = vpack.c.b16 %v65, %v65
  %vm70 = vcmask 257024
  %71 = vst.msk [vmem:[%s3] sm:$0xf] %vm70, %v66
  %72 = vst.msk [vmem:[%s3 + $0x4] sm:$0xf] %vm70, %v67
  // Predicated region
  $region14: #{_lambda_.4} parent=0 // pred_check
    _
  $region15: #{_lambda_.4} parent=0 // pred_check_branch
    %74 = sbr.rel (0) target = $region17
  $region16: #{_lambda_.4} parent=0 // pred_region
    _
  $region17: #{_lambda_.4} parent=0 // pred_fallthru
    _
  // Predicated region
  $region18: #{_lambda_.4} parent=0 // pred_check
    _
  $region19: #{_lambda_.4} parent=0 // pred_check_branch
    %76 = sbr.rel (0) target = $region21
  $region20: #{_lambda_.4} parent=0 // pred_region
    _
  $region21: #{_lambda_.4} parent=0 // pred_fallthru
    _

// kernel: _lambda_.7
$region0: #{_lambda_.7}
  #allocation0 [shape = 'u32[]', space=smem, size = 0x4, offset = 0x4, fixed_abs, tag = 'smem constant byte address 0x4 - core index']
  #allocation1 [shape = 'u32[144,128]{1,0:T(1,128)}', space=vmem, size = 0x12000, scoped, tag = 'internal scratch']
  %s0 = inlined_call_operand.vmem [shape: bf16[2,32], index: 0, kind: input, shape index: {}]
  %s1 = inlined_call_operand.vmem [shape: bf16[32,32], index: 1, kind: input, shape index: {}]
  %s2 = inlined_call_operand.vmem [shape: f32[1,32], index: 2, kind: input, shape index: {}]
  %s3 = inlined_call_operand.vmem [shape: bf16[32,128], index: 3, kind: input, shape index: {}]
  %s4 = inlined_call_operand.vmem [shape: f32[1,128], index: 4, kind: input, shape index: {}]
  %s5 = inlined_call_operand.hbm [shape: f32[2,128], index: 5, kind: output, shape index: {}]
  %s6 = sld [smem:[#allocation0]]
  $region30: #{_lambda_.7} parent=0
    _
  %s8 = ssub.s32 1, %s6
  %s9 = scalar_select 0, %s8, %s6
  $region1: #{_lambda_.7} parent=0
    #allocation2 [shape = 'u8[1024]{0}', space=vmem, size = 0x400, scoped, tag = 'output window, operand 0, single buffered']
    #allocation3 [shape = 's32[1]{0}', space=sflag, size = 0x4, scoped, tag = 'scoped memory for _lambda_.7']
    %10 = vsyncpa [#allocation3], 0
    // Predicated region
    $region2: #{_lambda_.7} parent=1 // pred_check
      _
    $region3: #{_lambda_.7} parent=1 // pred_check_branch
      %12 = sbr.rel (0) target = $region5
    $region4: #{_lambda_.7} parent=1 // pred_region
      _
    $region5: #{_lambda_.7} parent=1 // pred_fallthru
      _
    // Predicated region
    $region6: #{_lambda_.7} parent=1 // pred_check
      _
    $region7: #{_lambda_.7} parent=1 // pred_check_branch
      %14 = sbr.rel (0) target = $region9
    $region8: #{_lambda_.7} parent=1 // pred_region
      _
    $region9: #{_lambda_.7} parent=1 // pred_fallthru
      _
    // Predicated region
    $region10: #{_lambda_.7} parent=1 // pred_check
      _
    $region11: #{_lambda_.7} parent=1 // pred_check_branch
      %16 = sbr.rel (0) target = $region13
    $region12: #{_lambda_.7} parent=1 // pred_region
      _
    $region13: #{_lambda_.7} parent=1 // pred_fallthru
      _
    // Predicated region
    $region14: #{_lambda_.7} parent=1 // pred_check
      _
    $region15: #{_lambda_.7} parent=1 // pred_check_branch
      %18 = sbr.rel (0) target = $region17
    $region16: #{_lambda_.7} parent=1 // pred_region
      _
    $region17: #{_lambda_.7} parent=1 // pred_fallthru
      _
    // Predicated region
    $region18: #{_lambda_.7} parent=1 // pred_check
      _
    $region19: #{_lambda_.7} parent=1 // pred_check_branch
      %20 = sbr.rel (0) target = $region21
    $region20: #{_lambda_.7} parent=1 // pred_region
      _
    $region21: #{_lambda_.7} parent=1 // pred_fallthru
      _
    %v22 = vld [vmem:[%s0] sm:$0x1]
    %v23 = vld [vmem:[%s1] sm:$0xf]
    %v24 = vld [vmem:[%s1 + $0x4] sm:$0xf]
    %v25 = vld [vmem:[%s1 + $0x8] sm:$0xf]
    %v26 = vld [vmem:[%s1 + $0xc] sm:$0xf]
    %v27 = vld [vmem:[%s2] sm:$0x1]
    %v29 = vlaneseq
    %v30 = vshrl.u32 %v29, 7
    %v31 = vsub.s32 0, %v30
    %v32 = vrot.slane %v27, %v31
    %v38 = vunpack.c.l.b16 %v23
    %v39 = vunpack.c.l.b16 %v24
    %v40 = vunpack.c.l.b16 %v25
    %v41 = vunpack.c.l.b16 %v26
    %v42 = vpack.c.b16 %v39, %v38
    %v43 = vpack.c.b16 %v41, %v40
    %vm46 = vcmask 261120
    %v48 = vsel %vm46, %v22, 0
    %50 = vmatprep.subr.bf16.mxu0 0
    %51 = vmatpush1.bf16.msra.mxu0 %v42
    %52 = vmatprep.subr.bf16.mxu0 0
    %53 = vmatpush1.bf16.msra.mxu0 %v43
    %54 = vmatprep.subr.bf16.mxu0 0
    %55 = vmatpush1.bf16.msra.mxu0 0
    %56 = vmatprep.subr.bf16.mxu0 0
    %57 = vmatpush1.bf16.msra.mxu0 0
    %58 = vmatprep.subr.bf16.mxu0 0
    %59 = vmatpush1.bf16.msra.mxu0 0
    %60 = vmatprep.subr.bf16.mxu0 0
    %61 = vmatpush1.bf16.msra.mxu0 0
    %62 = vmatprep.subr.bf16.mxu0 0
    %63 = vmatpush1.bf16.msra.mxu0 0
    %64 = vmatprep.subr.bf16.mxu0 0
    %65 = vmatpush1.bf16.msra.mxu0 0
    %66 = vmatprep.subr.bf16.mxu0 0
    %67 = vmatpush1.bf16.msra.mxu0 0
    %68 = vmatprep.subr.bf16.mxu0 0
    %69 = vmatpush1.bf16.msra.mxu0 0
    %70 = vmatprep.subr.bf16.mxu0 0
    %71 = vmatpush1.bf16.msra.mxu0 0
    %72 = vmatprep.subr.bf16.mxu0 0
    %73 = vmatpush1.bf16.msra.mxu0 0
    %74 = vmatprep.subr.bf16.mxu0 0
    %75 = vmatpush1.bf16.msra.mxu0 0
    %76 = vmatprep.subr.bf16.mxu0 0
    %77 = vmatpush1.bf16.msra.mxu0 0
    %78 = vmatprep.subr.bf16.mxu0 0
    %79 = vmatpush1.bf16.msra.mxu0 0
    %80 = vmatprep.subr.bf16.mxu0 0
    %81 = vmatpush1.bf16.msra.mxu0 0
    %82 = vmatprep.mubr.bf16.mxu0 0
    %83 = vmatmul.mubr.bf16.gmra.mrb[0].mxu0 %v48
    %v84 = vpop.f32.mrb[0].mxu0
    %v85 = vadd.f32 %v32, %v84
    %v86 = vpop.f32.mrb[0].mxu0
    %v87 = vpop.f32.mrb[0].mxu0
    %v88 = vpop.f32.mrb[0].mxu0
    %89 = vdwg.mxu0
    %v90 = vtanh.pop %v85
    %v91 = vpack.c.bf16 %v90, %v90
    %v92 = vld [vmem:[%s3] sm:$0xf]
    %v93 = vld [vmem:[%s3 + $0x4] sm:$0xf]
    %v94 = vld [vmem:[%s3 + $0x8] sm:$0xf]
    %v95 = vld [vmem:[%s3 + $0xc] sm:$0xf]
    %v96 = vld [vmem:[%s4] sm:$0x1]
    %v98 = vlaneseq
    %v99 = vshrl.u32 %v98, 7
    %v100 = vsub.s32 0, %v99
    %v101 = vrot.slane %v96, %v100
    %v107 = vunpack.c.l.b16 %v92
    %v108 = vunpack.c.l.b16 %v93
    %v109 = vunpack.c.l.b16 %v94
    %v110 = vunpack.c.l.b16 %v95
    %v111 = vpack.c.b16 %v108, %v107
    %v112 = vpack.c.b16 %v110, %v109
    %v116 = vsel %vm46, %v91, 0
    %118 = vmatprep.subr.bf16.mxu0 0
    %119 = vmatpush1.bf16.msra.mxu0 %v111
    %120 = vmatprep.subr.bf16.mxu0 0
    %121 = vmatpush1.bf16.msra.mxu0 %v112
    %122 = vmatprep.subr.bf16.mxu0 0
    %123 = vmatpush1.bf16.msra.mxu0 0
    %124 = vmatprep.subr.bf16.mxu0 0
    %125 = vmatpush1.bf16.msra.mxu0 0
    %126 = vmatprep.subr.bf16.mxu0 0
    %127 = vmatpush1.bf16.msra.mxu0 0
    %128 = vmatprep.subr.bf16.mxu0 0
    %129 = vmatpush1.bf16.msra.mxu0 0
    %130 = vmatprep.subr.bf16.mxu0 0
    %131 = vmatpush1.bf16.msra.mxu0 0
    %132 = vmatprep.subr.bf16.mxu0 0
    %133 = vmatpush1.bf16.msra.mxu0 0
    %134 = vmatprep.subr.bf16.mxu0 0
    %135 = vmatpush1.bf16.msra.mxu0 0
    %136 = vmatprep.subr.bf16.mxu0 0
    %137 = vmatpush1.bf16.msra.mxu0 0
    %138 = vmatprep.subr.bf16.mxu0 0
    %139 = vmatpush1.bf16.msra.mxu0 0
    %140 = vmatprep.subr.bf16.mxu0 0
    %141 = vmatpush1.bf16.msra.mxu0 0
    %142 = vmatprep.subr.bf16.mxu0 0
    %143 = vmatpush1.bf16.msra.mxu0 0
    %144 = vmatprep.subr.bf16.mxu0 0
    %145 = vmatpush1.bf16.msra.mxu0 0
    %146 = vmatprep.subr.bf16.mxu0 0
    %147 = vmatpush1.bf16.msra.mxu0 0
    %148 = vmatprep.subr.bf16.mxu0 0
    %149 = vmatpush1.bf16.msra.mxu0 0
    %150 = vmatprep.mubr.bf16.mxu0 0
    %151 = vmatmul.mubr.bf16.gmra.mrb[0].mxu0 %v116
    %v152 = vpop.f32.mrb[0].mxu0
    %v153 = vadd.f32 %v101, %v152
    %v154 = vpop.f32.mrb[0].mxu0
    %v155 = vpop.f32.mrb[0].mxu0
    %v156 = vpop.f32.mrb[0].mxu0
    %157 = vdwg.mxu0
    %vm158 = vcmask 1041408
    %v159 = vsel %vm158, %v153, -inf
    %160 = vmax.xlane.f32.xlu0 %v159
    %v161 = vpop.xlane.xlu0 %160
    %v162 = vsub.f32 %v153, %v161
    %v163 = vmul.f32 %v162, 1.442695
    %v164 = vpow.pop %v163
    %v165 = vsel %vm158, %v164, 0.0
    %166 = vadd.xlane.f32.xlu0 %v165
    %v167 = vpop.xlane.xlu0 %166
    %v168 = vlog2.pop %v167
    %v169 = vmul.f32 %v168, 0.6931472
    %v170 = vsub.f32 %v162, %v169
    %171 = vst [vmem:[#allocation2] sm:$0x3] %v170
    // Predicated region
    $region22: #{_lambda_.7} parent=1 // pred_check
      _
    $region23: #{_lambda_.7} parent=1 // pred_check_branch
      %173 = sbr.rel (0) target = $region25
    $region24: #{_lambda_.7} parent=1 // pred_region
      %s175 = ssub.s32 32, 32
      %176 = vsyncadd [#allocation3], %s175
      %s178 = sshll.u32 [#allocation2], 4
      %s179 = int_to_ptr.vmem [resolvable:$true] %s178
      %181 = dma.vmem_to_hbm [thread:$0]  %s179, 32, %s5, [#allocation3]
    $region25: #{_lambda_.7} parent=1 // pred_fallthru
      _
    // Predicated region
    $region26: #{_lambda_.7} parent=1 // pred_check
      _
    $region27: #{_lambda_.7} parent=1 // pred_check_branch
      %183 = sbr.rel (0) target = $region29
    $region28: #{_lambda_.7} parent=1 // pred_region
      %184 = dma.done [#allocation3], 32
    $region29: #{_lambda_.7} parent=1 // pred_fallthru
      _
    %185 = vsyncpa [#allocation3], 1

// kernel: _lambda_.5
$region0: #{_lambda_.5}
  #allocation0 [shape = 'u32[]', space=smem, size = 0x4, offset = 0x4, fixed_abs, tag = 'smem constant byte address 0x4 - core index']
  #allocation1 [shape = 'u32[144,128]{1,0:T(1,128)}', space=vmem, size = 0x12000, scoped, tag = 'internal scratch']
  #allocation2 [shape = 'f32[8,32]{1,0:T(8,128)}', space=vmem, size = 0x1000, scoped, tag = 'scratch operand']
  %s0 = inlined_call_operand.vmem [shape: bf16[2,8,32], index: 0, kind: input, shape index: {}]
  %s1 = inlined_call_operand.vmem [shape: f32[2,1,8], index: 1, kind: input, shape index: {}]
  %s2 = inlined_call_operand.vmem [shape: bf16[32,96], index: 2, kind: input, shape index: {}]
  %s3 = inlined_call_operand.vmem [shape: f32[1,96], index: 3, kind: input, shape index: {}]
  %s4 = inlined_call_operand.vmem [shape: bf16[32,32], index: 4, kind: input, shape index: {}]
  %s5 = inlined_call_operand.vmem [shape: f32[1,32], index: 5, kind: input, shape index: {}]
  %s6 = inlined_call_operand.vmem [shape: f32[1,32], index: 6, kind: input, shape index: {}]
  %s7 = inlined_call_operand.vmem [shape: f32[1,32], index: 7, kind: input, shape index: {}]
  %s8 = inlined_call_operand.vmem [shape: bf16[32,64], index: 8, kind: input, shape index: {}]
  %s9 = inlined_call_operand.vmem [shape: f32[1,64], index: 9, kind: input, shape index: {}]
  %s10 = inlined_call_operand.vmem [shape: bf16[64,32], index: 10, kind: input, shape index: {}]
  %s11 = inlined_call_operand.vmem [shape: f32[1,32], index: 11, kind: input, shape index: {}]
  %s12 = inlined_call_operand.vmem [shape: f32[1,32], index: 12, kind: input, shape index: {}]
  %s13 = inlined_call_operand.vmem [shape: f32[1,32], index: 13, kind: input, shape index: {}]
  %s14 = inlined_call_operand.vmem [shape: bf16[2,8,32], index: 14, kind: output, shape index: {}]
  %s15 = sld [smem:[#allocation0]]
  $region89: #{_lambda_.5} parent=0
    _
  %s17 = ssub.s32 1, %s15
  %s18 = scalar_select 0, %s17, %s15
  loop: start=0, step=1, limit=4
  $region2: #{_lambda_.5} parent=0 // loop_pre_header
    _
  $region3: #{_lambda_.5} parent=0 // loop_header
    %s20 = sphi 0, %s24
    %p21 = scmp.ge.s32.totalorder %s20, 4
    %s30 = sphi 0, %s32
    %s33 = sphi 0, %s30
    %s34 = sphi 0, %s33
    %s50 = sphi 0, %s34
    %s56 = sphi 0, %s58
    %s59 = sphi 0, %s56
    %s60 = sphi 0, %s59
    %s76 = sphi 0, %s60
    %s80 = sphi 0, %s80
    %s82 = sphi 0, %s80
    %s83 = sphi 0, %s82
    %s97 = sphi 0, %s83
    %s101 = sphi 0, %s101
    %s103 = sphi 0, %s101
    %s104 = sphi 0, %s103
    %s118 = sphi 0, %s104
    %s122 = sphi 0, %s122
    %s124 = sphi 0, %s122
    %s125 = sphi 0, %s124
    %s139 = sphi 0, %s125
    %s143 = sphi 0, %s143
    %s145 = sphi 0, %s143
    %s146 = sphi 0, %s145
    %s160 = sphi 0, %s146
    %s164 = sphi 0, %s164
    %s166 = sphi 0, %s164
    %s167 = sphi 0, %s166
    %s181 = sphi 0, %s167
    %s185 = sphi 0, %s185
    %s187 = sphi 0, %s185
    %s188 = sphi 0, %s187
    %s202 = sphi 0, %s188
    %s206 = sphi 0, %s206
    %s208 = sphi 0, %s206
    %s209 = sphi 0, %s208
    %s223 = sphi 0, %s209
    %s227 = sphi 0, %s227
    %s229 = sphi 0, %s227
    %s230 = sphi 0, %s229
    %s244 = sphi 0, %s230
    %s248 = sphi 0, %s248
    %s250 = sphi 0, %s248
    %s251 = sphi 0, %s250
    %s265 = sphi 0, %s251
    %s269 = sphi 0, %s269
    %s271 = sphi 0, %s269
    %s272 = sphi 0, %s271
    %s286 = sphi 0, %s272
    %s290 = sphi 0, %s290
    %s292 = sphi 0, %s290
    %s293 = sphi 0, %s292
    %s307 = sphi 0, %s293
    %s311 = sphi 0, %s311
    %s313 = sphi 0, %s311
    %s314 = sphi 0, %s313
    %s328 = sphi 0, %s314
    %s334 = sphi 0, %s336
    %s337 = sphi 0, %s334
    %s338 = sphi 0, %s337
    %s354 = sphi 0, %s338
  $region4: #{_lambda_.5} parent=0 // loop_header_branch
    %23 = sbr.rel (%p21) target = $region8
  $region5: #{_lambda_.5} parent=0 // loop_body
    %s25 = ssub.s32 %s20, 1
    %s26 = ssub.s32 %s20, 2
    %s27 = sadd.s32 %s20, 1
    %s28 = ssub.s32 %s20, %s27
    %p29 = scmp.eq.s32.totalorder %s28, 0
    %s31 = sadd.s32 %s30, 1
    %s32 = scalar_select %p29, %s30, %s31
    %p35 = pneg %p29
    %p36 = scmp.eq.s32.totalorder %s20, 1
    %p37 = por %p35, %p36
    %p38 = scmp.ne.s32.totalorder %s30, %s33
    %p39 = scmp.eq.s32.totalorder %s20, 0
    %p40 = por %p38, %p39
    %p41 = scmp.ne.s32.totalorder %s30, %s33
    %p42 = scmp.eq.s32.totalorder %s25, 1
    %p43 = por %p41, %p42
    %p44 = scmp.ne.s32.totalorder %s33, %s34
    %p45 = scmp.eq.s32.totalorder %s25, 0
    %p46 = por %p44, %p45
    %p47 = scmp.ne.s32.totalorder %s33, %s34
    %p48 = scmp.eq.s32.totalorder %s26, 1
    %p49 = por %p47, %p48
    %p51 = scmp.ne.s32.totalorder %s34, %s50
    %p52 = scmp.eq.s32.totalorder %s26, 0
    %p53 = por %p51, %p52
    %s54 = ssub.s32 %s20, %s27
    %p55 = scmp.eq.s32.totalorder %s54, 0
    %s57 = sadd.s32 %s56, 1
    %s58 = scalar_select %p55, %s56, %s57
    %p61 = pneg %p55
    %p62 = scmp.eq.s32.totalorder %s20, 1
    %p63 = por %p61, %p62
    %p64 = scmp.ne.s32.totalorder %s56, %s59
    %p65 = scmp.eq.s32.totalorder %s20, 0
    %p66 = por %p64, %p65
    %p67 = scmp.ne.s32.totalorder %s56, %s59
    %p68 = scmp.eq.s32.totalorder %s25, 1
    %p69 = por %p67, %p68
    %p70 = scmp.ne.s32.totalorder %s59, %s60
    %p71 = scmp.eq.s32.totalorder %s25, 0
    %p72 = por %p70, %p71
    %p73 = scmp.ne.s32.totalorder %s59, %s60
    %p74 = scmp.eq.s32.totalorder %s26, 1
    %p75 = por %p73, %p74
    %p77 = scmp.ne.s32.totalorder %s60, %s76
    %p78 = scmp.eq.s32.totalorder %s26, 0
    %p79 = por %p77, %p78
    %s81 = sadd.s32 %s80, 1
    %p84 = scmp.eq.s32.totalorder %s20, 1
    %p85 = scmp.ne.s32.totalorder %s80, %s82
    %p86 = scmp.eq.s32.totalorder %s20, 0
    %p87 = por %p85, %p86
    %p88 = scmp.ne.s32.totalorder %s80, %s82
    %p89 = scmp.eq.s32.totalorder %s25, 1
    %p90 = por %p88, %p89
    %p91 = scmp.ne.s32.totalorder %s82, %s83
    %p92 = scmp.eq.s32.totalorder %s25, 0
    %p93 = por %p91, %p92
    %p94 = scmp.ne.s32.totalorder %s82, %s83
    %p95 = scmp.eq.s32.totalorder %s26, 1
    %p96 = por %p94, %p95
    %p98 = scmp.ne.s32.totalorder %s83, %s97
    %p99 = scmp.eq.s32.totalorder %s26, 0
    %p100 = por %p98, %p99
    %s102 = sadd.s32 %s101, 1
    %p105 = scmp.eq.s32.totalorder %s20, 1
    %p106 = scmp.ne.s32.totalorder %s101, %s103
    %p107 = scmp.eq.s32.totalorder %s20, 0
    %p108 = por %p106, %p107
    %p109 = scmp.ne.s32.totalorder %s101, %s103
    %p110 = scmp.eq.s32.totalorder %s25, 1
    %p111 = por %p109, %p110
    %p112 = scmp.ne.s32.totalorder %s103, %s104
    %p113 = scmp.eq.s32.totalorder %s25, 0
    %p114 = por %p112, %p113
    %p115 = scmp.ne.s32.totalorder %s103, %s104
    %p116 = scmp.eq.s32.totalorder %s26, 1
    %p117 = por %p115, %p116
    %p119 = scmp.ne.s32.totalorder %s104, %s118
    %p120 = scmp.eq.s32.totalorder %s26, 0
    %p121 = por %p119, %p120
    %s123 = sadd.s32 %s122, 1
    %p126 = scmp.eq.s32.totalorder %s20, 1
    %p127 = scmp.ne.s32.totalorder %s122, %s124
    %p128 = scmp.eq.s32.totalorder %s20, 0
    %p129 = por %p127, %p128
    %p130 = scmp.ne.s32.totalorder %s122, %s124
    %p131 = scmp.eq.s32.totalorder %s25, 1
    %p132 = por %p130, %p131
    %p133 = scmp.ne.s32.totalorder %s124, %s125
    %p134 = scmp.eq.s32.totalorder %s25, 0
    %p135 = por %p133, %p134
    %p136 = scmp.ne.s32.totalorder %s124, %s125
    %p137 = scmp.eq.s32.totalorder %s26, 1
    %p138 = por %p136, %p137
    %p140 = scmp.ne.s32.totalorder %s125, %s139
    %p141 = scmp.eq.s32.totalorder %s26, 0
    %p142 = por %p140, %p141
    %s144 = sadd.s32 %s143, 1
    %p147 = scmp.eq.s32.totalorder %s20, 1
    %p148 = scmp.ne.s32.totalorder %s143, %s145
    %p149 = scmp.eq.s32.totalorder %s20, 0
    %p150 = por %p148, %p149
    %p151 = scmp.ne.s32.totalorder %s143, %s145
    %p152 = scmp.eq.s32.totalorder %s25, 1
    %p153 = por %p151, %p152
    %p154 = scmp.ne.s32.totalorder %s145, %s146
    %p155 = scmp.eq.s32.totalorder %s25, 0
    %p156 = por %p154, %p155
    %p157 = scmp.ne.s32.totalorder %s145, %s146
    %p158 = scmp.eq.s32.totalorder %s26, 1
    %p159 = por %p157, %p158
    %p161 = scmp.ne.s32.totalorder %s146, %s160
    %p162 = scmp.eq.s32.totalorder %s26, 0
    %p163 = por %p161, %p162
    %s165 = sadd.s32 %s164, 1
    %p168 = scmp.eq.s32.totalorder %s20, 1
    %p169 = scmp.ne.s32.totalorder %s164, %s166
    %p170 = scmp.eq.s32.totalorder %s20, 0
    %p171 = por %p169, %p170
    %p172 = scmp.ne.s32.totalorder %s164, %s166
    %p173 = scmp.eq.s32.totalorder %s25, 1
    %p174 = por %p172, %p173
    %p175 = scmp.ne.s32.totalorder %s166, %s167
    %p176 = scmp.eq.s32.totalorder %s25, 0
    %p177 = por %p175, %p176
    %p178 = scmp.ne.s32.totalorder %s166, %s167
    %p179 = scmp.eq.s32.totalorder %s26, 1
    %p180 = por %p178, %p179
    %p182 = scmp.ne.s32.totalorder %s167, %s181
    %p183 = scmp.eq.s32.totalorder %s26, 0
    %p184 = por %p182, %p183
    %s186 = sadd.s32 %s185, 1
    %p189 = scmp.eq.s32.totalorder %s20, 1
    %p190 = scmp.ne.s32.totalorder %s185, %s187
    %p191 = scmp.eq.s32.totalorder %s20, 0
    %p192 = por %p190, %p191
    %p193 = scmp.ne.s32.totalorder %s185, %s187
    %p194 = scmp.eq.s32.totalorder %s25, 1
    %p195 = por %p193, %p194
    %p196 = scmp.ne.s32.totalorder %s187, %s188
    %p197 = scmp.eq.s32.totalorder %s25, 0
    %p198 = por %p196, %p197
    %p199 = scmp.ne.s32.totalorder %s187, %s188
    %p200 = scmp.eq.s32.totalorder %s26, 1
    %p201 = por %p199, %p200
    %p203 = scmp.ne.s32.totalorder %s188, %s202
    %p204 = scmp.eq.s32.totalorder %s26, 0
    %p205 = por %p203, %p204
    %s207 = sadd.s32 %s206, 1
    %p210 = scmp.eq.s32.totalorder %s20, 1
    %p211 = scmp.ne.s32.totalorder %s206, %s208
    %p212 = scmp.eq.s32.totalorder %s20, 0
    %p213 = por %p211, %p212
    %p214 = scmp.ne.s32.totalorder %s206, %s208
    %p215 = scmp.eq.s32.totalorder %s25, 1
    %p216 = por %p214, %p215
    %p217 = scmp.ne.s32.totalorder %s208, %s209
    %p218 = scmp.eq.s32.totalorder %s25, 0
    %p219 = por %p217, %p218
    %p220 = scmp.ne.s32.totalorder %s208, %s209
    %p221 = scmp.eq.s32.totalorder %s26, 1
    %p222 = por %p220, %p221
    %p224 = scmp.ne.s32.totalorder %s209, %s223
    %p225 = scmp.eq.s32.totalorder %s26, 0
    %p226 = por %p224, %p225
    %s228 = sadd.s32 %s227, 1
    %p231 = scmp.eq.s32.totalorder %s20, 1
    %p232 = scmp.ne.s32.totalorder %s227, %s229
    %p233 = scmp.eq.s32.totalorder %s20, 0
    %p234 = por %p232, %p233
    %p235 = scmp.ne.s32.totalorder %s227, %s229
    %p236 = scmp.eq.s32.totalorder %s25, 1
    %p237 = por %p235, %p236
    %p238 = scmp.ne.s32.totalorder %s229, %s230
    %p239 = scmp.eq.s32.totalorder %s25, 0
    %p240 = por %p238, %p239
    %p241 = scmp.ne.s32.totalorder %s229, %s230
    %p242 = scmp.eq.s32.totalorder %s26, 1
    %p243 = por %p241, %p242
    %p245 = scmp.ne.s32.totalorder %s230, %s244
    %p246 = scmp.eq.s32.totalorder %s26, 0
    %p247 = por %p245, %p246
    %s249 = sadd.s32 %s248, 1
    %p252 = scmp.eq.s32.totalorder %s20, 1
    %p253 = scmp.ne.s32.totalorder %s248, %s250
    %p254 = scmp.eq.s32.totalorder %s20, 0
    %p255 = por %p253, %p254
    %p256 = scmp.ne.s32.totalorder %s248, %s250
    %p257 = scmp.eq.s32.totalorder %s25, 1
    %p258 = por %p256, %p257
    %p259 = scmp.ne.s32.totalorder %s250, %s251
    %p260 = scmp.eq.s32.totalorder %s25, 0
    %p261 = por %p259, %p260
    %p262 = scmp.ne.s32.totalorder %s250, %s251
    %p263 = scmp.eq.s32.totalorder %s26, 1
    %p264 = por %p262, %p263
    %p266 = scmp.ne.s32.totalorder %s251, %s265
    %p267 = scmp.eq.s32.totalorder %s26, 0
    %p268 = por %p266, %p267
    %s270 = sadd.s32 %s269, 1
    %p273 = scmp.eq.s32.totalorder %s20, 1
    %p274 = scmp.ne.s32.totalorder %s269, %s271
    %p275 = scmp.eq.s32.totalorder %s20, 0
    %p276 = por %p274, %p275
    %p277 = scmp.ne.s32.totalorder %s269, %s271
    %p278 = scmp.eq.s32.totalorder %s25, 1
    %p279 = por %p277, %p278
    %p280 = scmp.ne.s32.totalorder %s271, %s272
    %p281 = scmp.eq.s32.totalorder %s25, 0
    %p282 = por %p280, %p281
    %p283 = scmp.ne.s32.totalorder %s271, %s272
    %p284 = scmp.eq.s32.totalorder %s26, 1
    %p285 = por %p283, %p284
    %p287 = scmp.ne.s32.totalorder %s272, %s286
    %p288 = scmp.eq.s32.totalorder %s26, 0
    %p289 = por %p287, %p288
    %s291 = sadd.s32 %s290, 1
    %p294 = scmp.eq.s32.totalorder %s20, 1
    %p295 = scmp.ne.s32.totalorder %s290, %s292
    %p296 = scmp.eq.s32.totalorder %s20, 0
    %p297 = por %p295, %p296
    %p298 = scmp.ne.s32.totalorder %s290, %s292
    %p299 = scmp.eq.s32.totalorder %s25, 1
    %p300 = por %p298, %p299
    %p301 = scmp.ne.s32.totalorder %s292, %s293
    %p302 = scmp.eq.s32.totalorder %s25, 0
    %p303 = por %p301, %p302
    %p304 = scmp.ne.s32.totalorder %s292, %s293
    %p305 = scmp.eq.s32.totalorder %s26, 1
    %p306 = por %p304, %p305
    %p308 = scmp.ne.s32.totalorder %s293, %s307
    %p309 = scmp.eq.s32.totalorder %s26, 0
    %p310 = por %p308, %p309
    %s312 = sadd.s32 %s311, 1
    %p315 = scmp.eq.s32.totalorder %s20, 1
    %p316 = scmp.ne.s32.totalorder %s311, %s313
    %p317 = scmp.eq.s32.totalorder %s20, 0
    %p318 = por %p316, %p317
    %p319 = scmp.ne.s32.totalorder %s311, %s313
    %p320 = scmp.eq.s32.totalorder %s25, 1
    %p321 = por %p319, %p320
    %p322 = scmp.ne.s32.totalorder %s313, %s314
    %p323 = scmp.eq.s32.totalorder %s25, 0
    %p324 = por %p322, %p323
    %p325 = scmp.ne.s32.totalorder %s313, %s314
    %p326 = scmp.eq.s32.totalorder %s26, 1
    %p327 = por %p325, %p326
    %p329 = scmp.ne.s32.totalorder %s314, %s328
    %p330 = scmp.eq.s32.totalorder %s26, 0
    %p331 = por %p329, %p330
    %s332 = ssub.s32 %s20, %s27
    %p333 = scmp.eq.s32.totalorder %s332, 0
    %s335 = sadd.s32 %s334, 1
    %s336 = scalar_select %p333, %s334, %s335
    %p339 = pneg %p333
    %p340 = scmp.eq.s32.totalorder %s20, 1
    %p341 = por %p339, %p340
    %p342 = scmp.ne.s32.totalorder %s334, %s337
    %p343 = scmp.eq.s32.totalorder %s20, 0
    %p344 = por %p342, %p343
    %p345 = scmp.ne.s32.totalorder %s334, %s337
    %p346 = scmp.eq.s32.totalorder %s25, 1
    %p347 = por %p345, %p346
    %p348 = scmp.ne.s32.totalorder %s337, %s338
    %p349 = scmp.eq.s32.totalorder %s25, 0
    %p350 = por %p348, %p349
    %p351 = scmp.ne.s32.totalorder %s337, %s338
    %p352 = scmp.eq.s32.totalorder %s26, 1
    %p353 = por %p351, %p352
    %p355 = scmp.ne.s32.totalorder %s338, %s354
    %p356 = scmp.eq.s32.totalorder %s26, 0
    %p357 = por %p355, %p356
    %p358 = scmp.le.s32.totalorder 1, %s20
    %p359 = scmp.lt.s32.totalorder %s20, 3
    %p360 = pnand %p358, %p359
    %p361 = pneg %p360
    // Predicated region
    $region9: #{_lambda_.5} parent=5 // pred_check
      _
    $region10: #{_lambda_.5} parent=5 // pred_check_branch
      %363 = sbr.rel (%p360) target = $region12
    $region11: #{_lambda_.5} parent=5 // pred_region
      %s364 = ssub.s32 %s20, 1
      // Predicated region
      $region13: #{_lambda_.5} parent=11 // pred_check
        %p365 = pneg %p93
      $region14: #{_lambda_.5} parent=11 // pred_check_branch
        %367 = sbr.rel (%p365) target = $region16
      $region15: #{_lambda_.5} parent=11 // pred_region
        _
      $region16: #{_lambda_.5} parent=11 // pred_fallthru
        _
      // Predicated region
      $region17: #{_lambda_.5} parent=11 // pred_check
        %p368 = pneg %p114
      $region18: #{_lambda_.5} parent=11 // pred_check_branch
        %370 = sbr.rel (%p368) target = $region20
      $region19: #{_lambda_.5} parent=11 // pred_region
        _
      $region20: #{_lambda_.5} parent=11 // pred_fallthru
        _
      // Predicated region
      $region21: #{_lambda_.5} parent=11 // pred_check
        %p371 = pneg %p135
      $region22: #{_lambda_.5} parent=11 // pred_check_branch
        %373 = sbr.rel (%p371) target = $region24
      $region23: #{_lambda_.5} parent=11 // pred_region
        _
      $region24: #{_lambda_.5} parent=11 // pred_fallthru
        _
      // Predicated region
      $region25: #{_lambda_.5} parent=11 // pred_check
        %p374 = pneg %p156
      $region26: #{_lambda_.5} parent=11 // pred_check_branch
        %376 = sbr.rel (%p374) target = $region28
      $region27: #{_lambda_.5} parent=11 // pred_region
        _
      $region28: #{_lambda_.5} parent=11 // pred_fallthru
        _
      // Predicated region
      $region29: #{_lambda_.5} parent=11 // pred_check
        %p377 = pneg %p177
      $region30: #{_lambda_.5} parent=11 // pred_check_branch
        %379 = sbr.rel (%p377) target = $region32
      $region31: #{_lambda_.5} parent=11 // pred_region
        _
      $region32: #{_lambda_.5} parent=11 // pred_fallthru
        _
      // Predicated region
      $region33: #{_lambda_.5} parent=11 // pred_check
        %p380 = pneg %p198
      $region34: #{_lambda_.5} parent=11 // pred_check_branch
        %382 = sbr.rel (%p380) target = $region36
      $region35: #{_lambda_.5} parent=11 // pred_region
        _
      $region36: #{_lambda_.5} parent=11 // pred_fallthru
        _
      // Predicated region
      $region37: #{_lambda_.5} parent=11 // pred_check
        %p383 = pneg %p219
      $region38: #{_lambda_.5} parent=11 // pred_check_branch
        %385 = sbr.rel (%p383) target = $region40
      $region39: #{_lambda_.5} parent=11 // pred_region
        _
      $region40: #{_lambda_.5} parent=11 // pred_fallthru
        _
      // Predicated region
      $region41: #{_lambda_.5} parent=11 // pred_check
        %p386 = pneg %p240
      $region42: #{_lambda_.5} parent=11 // pred_check_branch
        %388 = sbr.rel (%p386) target = $region44
      $region43: #{_lambda_.5} parent=11 // pred_region
        _
      $region44: #{_lambda_.5} parent=11 // pred_fallthru
        _
      // Predicated region
      $region45: #{_lambda_.5} parent=11 // pred_check
        %p389 = pneg %p261
      $region46: #{_lambda_.5} parent=11 // pred_check_branch
        %391 = sbr.rel (%p389) target = $region48
      $region47: #{_lambda_.5} parent=11 // pred_region
        _
      $region48: #{_lambda_.5} parent=11 // pred_fallthru
        _
      // Predicated region
      $region49: #{_lambda_.5} parent=11 // pred_check
        %p392 = pneg %p282
      $region50: #{_lambda_.5} parent=11 // pred_check_branch
        %394 = sbr.rel (%p392) target = $region52
      $region51: #{_lambda_.5} parent=11 // pred_region
        _
      $region52: #{_lambda_.5} parent=11 // pred_fallthru
        _
      // Predicated region
      $region53: #{_lambda_.5} parent=11 // pred_check
        %p395 = pneg %p303
      $region54: #{_lambda_.5} parent=11 // pred_check_branch
        %397 = sbr.rel (%p395) target = $region56
      $region55: #{_lambda_.5} parent=11 // pred_region
        _
      $region56: #{_lambda_.5} parent=11 // pred_fallthru
        _
      // Predicated region
      $region57: #{_lambda_.5} parent=11 // pred_check
        %p398 = pneg %p324
      $region58: #{_lambda_.5} parent=11 // pred_check_branch
        %400 = sbr.rel (%p398) target = $region60
      $region59: #{_lambda_.5} parent=11 // pred_region
        _
      $region60: #{_lambda_.5} parent=11 // pred_fallthru
        _
    $region12: #{_lambda_.5} parent=5 // pred_fallthru
      _
    %p401 = scmp.lt.s32.totalorder %s20, 2
    // Predicated region
    $region61: #{_lambda_.5} parent=5 // pred_check
      %p402 = pneg %p401
    $region62: #{_lambda_.5} parent=5 // pred_check_branch
      %404 = sbr.rel (%p402) target = $region64
    $region63: #{_lambda_.5} parent=5 // pred_region
      // Predicated region
      $region65: #{_lambda_.5} parent=63 // pred_check
        %p405 = pneg %p40
      $region66: #{_lambda_.5} parent=63 // pred_check_branch
        %407 = sbr.rel (%p405) target = $region68
      $region67: #{_lambda_.5} parent=63 // pred_region
        %p408 = scmp.lt.s32.totalorder %s20, 1
        %s409 = scalar_select %p408, %s20, 1
        %s410 = smul.addr %s409, 4
        %s411 = scalar_lea.vmem %s0, %s410
      $region68: #{_lambda_.5} parent=63 // pred_fallthru
        _
      // Predicated region
      $region69: #{_lambda_.5} parent=63 // pred_check
        %p412 = pneg %p66
      $region70: #{_lambda_.5} parent=63 // pred_check_branch
        %414 = sbr.rel (%p412) target = $region72
      $region71: #{_lambda_.5} parent=63 // pred_region
        %p415 = scmp.lt.s32.totalorder %s20, 1
        %s416 = scalar_select %p415, %s20, 1
        %s417 = scalar_lea.vmem %s1, %s416
      $region72: #{_lambda_.5} parent=63 // pred_fallthru
        _
    $region64: #{_lambda_.5} parent=5 // pred_fallthru
      _
    %p418 = scmp.le.s32.totalorder 1, %s20
    %p419 = scmp.lt.s32.totalorder %s20, 3
    %p420 = pnand %p418, %p419
    %p421 = pneg %p420
    // Predicated region
    $region73: #{_lambda_.5} parent=5 // pred_check
      _
    $region74: #{_lambda_.5} parent=5 // pred_check_branch
      %423 = sbr.rel (%p420) target = $region76
    $region75: #{_lambda_.5} parent=5 // pred_region
      %s424 = ssub.s32 %s20, 1
      %p425 = scmp.lt.s32.totalorder %s25, 1
      %s426 = scalar_select %p425, %s25, 1
      %s427 = smul.addr %s426, 4
      %s428 = scalar_lea.vmem %s0, %s427
      %p429 = pneg %p46
      %p430 = pneg %p43
      %p431 = scmp.lt.s32.totalorder %s25, 1
      %s432 = scalar_select %p431, %s25, 1
      %s433 = scalar_lea.vmem %s1, %s432
      %p434 = pneg %p72
      %p435 = pneg %p69
      %p436 = pneg %p93
      %p437 = pneg %p90
      %p438 = pneg %p114
      %p439 = pneg %p111
      %p440 = pneg %p135
      %p441 = pneg %p132
      %p442 = pneg %p156
      %p443 = pneg %p153
      %p444 = pneg %p177
      %p445 = pneg %p174
      %p446 = pneg %p198
      %p447 = pneg %p195
      %p448 = pneg %p219
      %p449 = pneg %p216
      %p450 = pneg %p240
      %p451 = pneg %p237
      %p452 = pneg %p261
      %p453 = pneg %p258
      %p454 = pneg %p282
      %p455 = pneg %p279
      %p456 = pneg %p303
      %p457 = pneg %p300
      %p458 = pneg %p324
      %p459 = pneg %p321
      %p460 = pneg %p350
      %p461 = pneg %p347
      %p462 = scmp.lt.s32.totalorder %s25, 1
      %s463 = scalar_select %p462, %s25, 1
      %s464 = smul.addr %s463, 4
      %s465 = scalar_lea.vmem %s14, %s464
      %p466 = scmp.lt.s32.totalorder %s25, 1
      %s467 = scalar_select %p466, %s25, 1
      %s468 = smul.addr %s467, 4
      %s469 = scalar_lea.vmem %s0, %s468
      %p470 = scmp.lt.s32.totalorder %s25, 1
      %s471 = scalar_select %p470, %s25, 1
      %s472 = scalar_lea.vmem %s1, %s471
      %p473 = scmp.lt.s32.totalorder %s25, 1
      %s474 = scalar_select %p473, %s25, 1
      %s475 = smul.addr %s474, 4
      %s476 = scalar_lea.vmem %s14, %s475
      %v478 = vld [vmem:[%s469] sm:$0xf]
      %v479 = vunpack.c.l.bf16 %v478
      %v480 = vld [vmem:[%s472] sm:$0x1]
      %v481 = vld [vmem:[%s2] sm:$0xf]
      %v482 = vld [vmem:[%s2 + $0x4] sm:$0xf]
      %v483 = vld [vmem:[%s2 + $0x8] sm:$0xf]
      %v484 = vld [vmem:[%s2 + $0xc] sm:$0xf]
      %v485 = vld [vmem:[%s3] sm:$0x1]
      %v487 = vlaneseq
      %v488 = vshrl.u32 %v487, 7
      %v489 = vsub.s32 0, %v488
      %v490 = vrot.slane %v485, %v489
      %v496 = vunpack.c.l.b16 %v481
      %v497 = vunpack.c.l.b16 %v482
      %v498 = vunpack.c.l.b16 %v483
      %v499 = vunpack.c.l.b16 %v484
      %v500 = vpack.c.b16 %v497, %v496
      %v501 = vpack.c.b16 %v499, %v498
      %vm504 = vcmask 261120
      %v506 = vsel %vm504, %v478, 0
      %508 = vmatprep.subr.bf16.mxu0 0
      %509 = vmatpush1.bf16.msra.mxu0 %v500
      %510 = vmatprep.subr.bf16.mxu0 0
      %511 = vmatpush1.bf16.msra.mxu0 %v501
      %512 = vmatprep.subr.bf16.mxu0 0
      %513 = vmatpush1.bf16.msra.mxu0 0
      %514 = vmatprep.subr.bf16.mxu0 0
      %515 = vmatpush1.bf16.msra.mxu0 0
      %516 = vmatprep.subr.bf16.mxu0 0
      %517 = vmatpush1.bf16.msra.mxu0 0
      %518 = vmatprep.subr.bf16.mxu0 0
      %519 = vmatpush1.bf16.msra.mxu0 0
      %520 = vmatprep.subr.bf16.mxu0 0
      %521 = vmatpush1.bf16.msra.mxu0 0
      %522 = vmatprep.subr.bf16.mxu0 0
      %523 = vmatpush1.bf16.msra.mxu0 0
      %524 = vmatprep.subr.bf16.mxu0 0
      %525 = vmatpush1.bf16.msra.mxu0 0
      %526 = vmatprep.subr.bf16.mxu0 0
      %527 = vmatpush1.bf16.msra.mxu0 0
      %528 = vmatprep.subr.bf16.mxu0 0
      %529 = vmatpush1.bf16.msra.mxu0 0
      %530 = vmatprep.subr.bf16.mxu0 0
      %531 = vmatpush1.bf16.msra.mxu0 0
      %532 = vmatprep.subr.bf16.mxu0 0
      %533 = vmatpush1.bf16.msra.mxu0 0
      %534 = vmatprep.subr.bf16.mxu0 0
      %535 = vmatpush1.bf16.msra.mxu0 0
      %536 = vmatprep.subr.bf16.mxu0 0
      %537 = vmatpush1.bf16.msra.mxu0 0
      %538 = vmatprep.subr.bf16.mxu0 0
      %539 = vmatpush1.bf16.msra.mxu0 0
      %540 = vmatprep.mubr.bf16.mxu0 0
      %541 = vmatmul.mubr.bf16.gmra.mrb[0].mxu0 %v506
      %v542 = vpop.f32.mrb[0].mxu0
      %v543 = vadd.f32 %v490, %v542
      %v544 = vpop.f32.mrb[0].mxu0
      %v545 = vpop.f32.mrb[0].mxu0
      %v546 = vpop.f32.mrb[0].mxu0
      %547 = vdwg.mxu0
      %v549 = vlaneseq
      %v550 = vshrl.u32 %v549, 7
      %v551 = vsub.s32 0, %v550
      %v552 = vrot.slane %v480, %v551
      %555 = vrot.lane.b32.xlu0 %v543, 96
      %v556 = vpop.permute.xlu0 %555
      %vm557 = vcmask 64512
      %v558 = vsel %vm557, %v543, 0
      %v560 = vsel %vm557, %v556, 0
      %562 = vmatprep.subr.mxu0 0.0
      %563 = vmatpush1.xpose.msra.mxu0 %v560
      %564 = vmatprep.subr.mxu0 0.0
      %565 = vmatpush1.xpose.msra.mxu0 0.0
      %566 = vmatprep.subr.mxu0 0.0
      %567 = vmatpush1.xpose.msra.mxu0 0.0
      %568 = vmatprep.subr.mxu0 0.0
      %569 = vmatpush1.xpose.msra.mxu0 0.0
      %570 = vmatprep.subr.mxu0 0.0
      %571 = vmatpush1.xpose.msra.mxu0 0.0
      %572 = vmatprep.subr.mxu0 0.0
      %573 = vmatpush1.xpose.msra.mxu0 0.0
      %574 = vmatprep.subr.mxu0 0.0
      %575 = vmatpush1.xpose.msra.mxu0 0.0
      %576 = vmatprep.subr.mxu0 0.0
      %577 = vmatpush1.xpose.msra.mxu0 0.0
      %578 = vmatprep.subr.mxu0 0.0
      %579 = vmatpush1.xpose.msra.mxu0 0.0
      %580 = vmatprep.subr.mxu0 0.0
      %581 = vmatpush1.xpose.msra.mxu0 0.0
      %582 = vmatprep.subr.mxu0 0.0
      %583 = vmatpush1.xpose.msra.mxu0 0.0
      %584 = vmatprep.subr.mxu0 0.0
      %585 = vmatpush1.xpose.msra.mxu0 0.0
      %586 = vmatprep.subr.mxu0 0.0
      %587 = vmatpush1.xpose.msra.mxu0 0.0
      %588 = vmatprep.subr.mxu0 0.0
      %589 = vmatpush1.xpose.msra.mxu0 0.0
      %590 = vmatprep.subr.mxu0 0.0
      %591 = vmatpush1.xpose.msra.mxu0 0.0
      %592 = vmatprep.subr.mxu0 0.0
      %593 = vmatpush1.xpose.msra.mxu0 0.0
      %594 = vmatprep.subr.mxu0 0.0
      %595 = vmatpush1.xpose.msra.mxu0 0.0
      %596 = vmatprep.subr.mxu0 0.0
      %597 = vmatpush1.xpose.msra.mxu0 0.0
      %598 = vmatprep.subr.mxu0 0.0
      %599 = vmatpush1.xpose.msra.mxu0 0.0
      %600 = vmatprep.subr.mxu0 0.0
      %601 = vmatpush1.xpose.msra.mxu0 0.0
      %602 = vmatprep.subr.mxu0 0.0
      %603 = vmatpush1.xpose.msra.mxu0 0.0
      %604 = vmatprep.subr.mxu0 0.0
      %605 = vmatpush1.xpose.msra.mxu0 0.0
      %606 = vmatprep.subr.mxu0 0.0
      %607 = vmatpush1.xpose.msra.mxu0 0.0
      %608 = vmatprep.subr.mxu0 0.0
      %609 = vmatpush1.xpose.msra.mxu0 0.0
      %610 = vmatprep.subr.mxu0 0.0
      %611 = vmatpush1.xpose.msra.mxu0 0.0
      %612 = vmatprep.subr.mxu0 0.0
      %613 = vmatpush1.xpose.msra.mxu0 0.0
      %614 = vmatprep.subr.mxu0 0.0
      %615 = vmatpush1.xpose.msra.mxu0 0.0
      %616 = vmatprep.subr.mxu0 0.0
      %617 = vmatpush1.xpose.msra.mxu0 0.0
      %618 = vmatprep.subr.mxu0 0.0
      %619 = vmatpush1.xpose.msra.mxu0 0.0
      %620 = vmatprep.subr.mxu0 0.0
      %621 = vmatpush1.xpose.msra.mxu0 0.0
      %622 = vmatprep.subr.mxu0 0.0
      %623 = vmatpush1.xpose.msra.mxu0 0.0
      %624 = vmatprep.subr.mxu0 0.0
      %625 = vmatpush1.xpose.msra.mxu0 0.0
      %626 = vmatprep.mubr.f32.mxu0 0.0
      %627 = vmatmul.mubr.f32.gmra.mrb[0].mxu0 %v558
      %v628 = vpop.f32.mrb[0].mxu0
      %v629 = vadd.f32 %v552, %v628
      %v630 = vpop.f32.mrb[0].mxu0
      %631 = vdwg.mxu0
      %v632 = vsel %vm557, %v629, -inf
      %633 = vmax.xlane.f32.xlu0 %v632
      %v634 = vpop.xlane.xlu0 %633
      %v635 = vsub.f32 %v629, %v634
      %v636 = vmul.f32 %v635, 1.442695
      %v637 = vpow.pop %v636
      %v638 = vsel %vm557, %v637, 0.0
      %639 = vadd.xlane.f32.xlu0 %v638
      %v640 = vpop.xlane.xlu0 %639
      %v641 = vrcp.pop %v640
      %v642 = vmul.f32 %v637, %v641
      %v643 = vpack.c.bf16 %v642, %v642
      %v644 = vpack.c.bf16 %v543, %v543
      %646 = vrot.lane.b32.xlu0 %v644, 64
      %v647 = vpop.permute.xlu0 %646
      %v649 = vsel %vm557, %v643, 0
      %vm651 = vcmask 1043456
      %v653 = vsel %vm651, %v647, 0
      %655 = vmatprep.subr.bf16.mxu0 0
      %656 = vmatpush1.bf16.msra.mxu0 %v653
      %657 = vmatprep.subr.bf16.mxu0 0
      %658 = vmatpush1.bf16.msra.mxu0 0
      %659 = vmatprep.subr.bf16.mxu0 0
      %660 = vmatpush1.bf16.msra.mxu0 0
      %661 = vmatprep.subr.bf16.mxu0 0
      %662 = vmatpush1.bf16.msra.mxu0 0
      %663 = vmatprep.subr.bf16.mxu0 0
      %664 = vmatpush1.bf16.msra.mxu0 0
      %665 = vmatprep.subr.bf16.mxu0 0
      %666 = vmatpush1.bf16.msra.mxu0 0
      %667 = vmatprep.subr.bf16.mxu0 0
      %668 = vmatpush1.bf16.msra.mxu0 0
      %669 = vmatprep.subr.bf16.mxu0 0
      %670 = vmatpush1.bf16.msra.mxu0 0
      %671 = vmatprep.subr.bf16.mxu0 0
      %672 = vmatpush1.bf16.msra.mxu0 0
      %673 = vmatprep.subr.bf16.mxu0 0
      %674 = vmatpush1.bf16.msra.mxu0 0
      %675 = vmatprep.subr.bf16.mxu0 0
      %676 = vmatpush1.bf16.msra.mxu0 0
      %677 = vmatprep.subr.bf16.mxu0 0
      %678 = vmatpush1.bf16.msra.mxu0 0
      %679 = vmatprep.subr.bf16.mxu0 0
      %680 = vmatpush1.bf16.msra.mxu0 0
      %681 = vmatprep.subr.bf16.mxu0 0
      %682 = vmatpush1.bf16.msra.mxu0 0
      %683 = vmatprep.subr.bf16.mxu0 0
      %684 = vmatpush1.bf16.msra.mxu0 0
      %685 = vmatprep.subr.bf16.mxu0 0
      %686 = vmatpush1.bf16.msra.mxu0 0
      %687 = vmatprep.mubr.bf16.mxu0 0
      %688 = vmatmul.mubr.bf16.gmra.mrb[0].mxu0 %v649
      %v689 = vpop.f32.mrb[0].mxu0
      %v690 = vadd.f32 0.0, %v689
      %v691 = vpop.f32.mrb[0].mxu0
      %v692 = vpop.f32.mrb[0].mxu0
      %v693 = vpop.f32.mrb[0].mxu0
      %694 = vdwg.mxu0
      %695 = vst.msk [vmem:[#allocation2] sm:$0xff] %vm557, %v690
      %696 = vrot.lane.b32.xlu0 %v543, 120
      %v697 = vpop.permute.xlu0 %696
      %698 = vrot.lane.b32.xlu0 %v543, 88
      %v699 = vpop.permute.xlu0 %698
      %v700 = vsel %vm557, %v697, 0
      %v702 = vsel %vm557, %v699, 0
      %704 = vmatprep.subr.mxu0 0.0
      %705 = vmatpush1.xpose.msra.mxu0 %v702
      %706 = vmatprep.subr.mxu0 0.0
      %707 = vmatpush1.xpose.msra.mxu0 0.0
      %708 = vmatprep.subr.mxu0 0.0
      %709 = vmatpush1.xpose.msra.mxu0 0.0
      %710 = vmatprep.subr.mxu0 0.0
      %711 = vmatpush1.xpose.msra.mxu0 0.0
      %712 = vmatprep.subr.mxu0 0.0
      %713 = vmatpush1.xpose.msra.mxu0 0.0
      %714 = vmatprep.subr.mxu0 0.0
      %715 = vmatpush1.xpose.msra.mxu0 0.0
      %716 = vmatprep.subr.mxu0 0.0
      %717 = vmatpush1.xpose.msra.mxu0 0.0
      %718 = vmatprep.subr.mxu0 0.0
      %719 = vmatpush1.xpose.msra.mxu0 0.0
      %720 = vmatprep.subr.mxu0 0.0
      %721 = vmatpush1.xpose.msra.mxu0 0.0
      %722 = vmatprep.subr.mxu0 0.0
      %723 = vmatpush1.xpose.msra.mxu0 0.0
      %724 = vmatprep.subr.mxu0 0.0
      %725 = vmatpush1.xpose.msra.mxu0 0.0
      %726 = vmatprep.subr.mxu0 0.0
      %727 = vmatpush1.xpose.msra.mxu0 0.0
      %728 = vmatprep.subr.mxu0 0.0
      %729 = vmatpush1.xpose.msra.mxu0 0.0
      %730 = vmatprep.subr.mxu0 0.0
      %731 = vmatpush1.xpose.msra.mxu0 0.0
      %732 = vmatprep.subr.mxu0 0.0
      %733 = vmatpush1.xpose.msra.mxu0 0.0
      %734 = vmatprep.subr.mxu0 0.0
      %735 = vmatpush1.xpose.msra.mxu0 0.0
      %736 = vmatprep.subr.mxu0 0.0
      %737 = vmatpush1.xpose.msra.mxu0 0.0
      %738 = vmatprep.subr.mxu0 0.0
      %739 = vmatpush1.xpose.msra.mxu0 0.0
      %740 = vmatprep.subr.mxu0 0.0
      %741 = vmatpush1.xpose.msra.mxu0 0.0
      %742 = vmatprep.subr.mxu0 0.0
      %743 = vmatpush1.xpose.msra.mxu0 0.0
      %744 = vmatprep.subr.mxu0 0.0
      %745 = vmatpush1.xpose.msra.mxu0 0.0
      %746 = vmatprep.subr.mxu0 0.0
      %747 = vmatpush1.xpose.msra.mxu0 0.0
      %748 = vmatprep.subr.mxu0 0.0
      %749 = vmatpush1.xpose.msra.mxu0 0.0
      %750 = vmatprep.subr.mxu0 0.0
      %751 = vmatpush1.xpose.msra.mxu0 0.0
      %752 = vmatprep.subr.mxu0 0.0
      %753 = vmatpush1.xpose.msra.mxu0 0.0
      %754 = vmatprep.subr.mxu0 0.0
      %755 = vmatpush1.xpose.msra.mxu0 0.0
      %756 = vmatprep.subr.mxu0 0.0
      %757 = vmatpush1.xpose.msra.mxu0 0.0
      %758 = vmatprep.subr.mxu0 0.0
      %759 = vmatpush1.xpose.msra.mxu0 0.0
      %760 = vmatprep.subr.mxu0 0.0
      %761 = vmatpush1.xpose.msra.mxu0 0.0
      %762 = vmatprep.subr.mxu0 0.0
      %763 = vmatpush1.xpose.msra.mxu0 0.0
      %764 = vmatprep.subr.mxu0 0.0
      %765 = vmatpush1.xpose.msra.mxu0 0.0
      %766 = vmatprep.subr.mxu0 0.0
      %767 = vmatpush1.xpose.msra.mxu0 0.0
      %768 = vmatprep.mubr.f32.mxu0 0.0
      %769 = vmatmul.mubr.f32.gmra.mrb[0].mxu0 %v700
      %v770 = vpop.f32.mrb[0].mxu0
      %v771 = vadd.f32 %v552, %v770
      %v772 = vpop.f32.mrb[0].mxu0
      %773 = vdwg.mxu0
      %v774 = vsel %vm557, %v771, -inf
      %775 = vmax.xlane.f32.xlu0 %v774
      %v776 = vpop.xlane.xlu0 %775
      %v777 = vsub.f32 %v771, %v776
      %v778 = vmul.f32 %v777, 1.442695
      %v779 = vpow.pop %v778
      %v780 = vsel %vm557, %v779, 0.0
      %781 = vadd.xlane.f32.xlu0 %v780
      %v782 = vpop.xlane.xlu0 %781
      %v783 = vrcp.pop %v782
      %v784 = vmul.f32 %v779, %v783
      %v785 = vpack.c.bf16 %v784, %v784
      %786 = vrot.lane.b32.xlu0 %v644, 56
      %v787 = vpop.permute.xlu0 %786
      %v789 = vsel %vm557, %v785, 0
      %v792 = vsel %vm651, %v787, 0
      %794 = vmatprep.subr.bf16.mxu0 0
      %795 = vmatpush1.bf16.msra.mxu0 %v792
      %796 = vmatprep.subr.bf16.mxu0 0
      %797 = vmatpush1.bf16.msra.mxu0 0
      %798 = vmatprep.subr.bf16.mxu0 0
      %799 = vmatpush1.bf16.msra.mxu0 0
      %800 = vmatprep.subr.bf16.mxu0 0
      %801 = vmatpush1.bf16.msra.mxu0 0
      %802 = vmatprep.subr.bf16.mxu0 0
      %803 = vmatpush1.bf16.msra.mxu0 0
      %804 = vmatprep.subr.bf16.mxu0 0
      %805 = vmatpush1.bf16.msra.mxu0 0
      %806 = vmatprep.subr.bf16.mxu0 0
      %807 = vmatpush1.bf16.msra.mxu0 0
      %808 = vmatprep.subr.bf16.mxu0 0
      %809 = vmatpush1.bf16.msra.mxu0 0
      %810 = vmatprep.subr.bf16.mxu0 0
      %811 = vmatpush1.bf16.msra.mxu0 0
      %812 = vmatprep.subr.bf16.mxu0 0
      %813 = vmatpush1.bf16.msra.mxu0 0
      %814 = vmatprep.subr.bf16.mxu0 0
      %815 = vmatpush1.bf16.msra.mxu0 0
      %816 = vmatprep.subr.bf16.mxu0 0
      %817 = vmatpush1.bf16.msra.mxu0 0
      %818 = vmatprep.subr.bf16.mxu0 0
      %819 = vmatpush1.bf16.msra.mxu0 0
      %820 = vmatprep.subr.bf16.mxu0 0
      %821 = vmatpush1.bf16.msra.mxu0 0
      %822 = vmatprep.subr.bf16.mxu0 0
      %823 = vmatpush1.bf16.msra.mxu0 0
      %824 = vmatprep.subr.bf16.mxu0 0
      %825 = vmatpush1.bf16.msra.mxu0 0
      %826 = vmatprep.mubr.bf16.mxu0 0
      %827 = vmatmul.mubr.bf16.gmra.mrb[0].mxu0 %v789
      %v828 = vpop.f32.mrb[0].mxu0
      %v829 = vadd.f32 0.0, %v828
      %v830 = vpop.f32.mrb[0].mxu0
      %v831 = vpop.f32.mrb[0].mxu0
      %v832 = vpop.f32.mrb[0].mxu0
      %833 = vdwg.mxu0
      %835 = vrot.lane.b32.xlu0 %v829, 8
      %v836 = vpop.permute.xlu0 %835
      %vm838 = vcmask 130112
      %839 = vst.msk [vmem:[#allocation2] sm:$0xff] %vm838, %v836
      %840 = vrot.lane.b32.xlu0 %v543, 112
      %v841 = vpop.permute.xlu0 %840
      %842 = vrot.lane.b32.xlu0 %v543, 80
      %v843 = vpop.permute.xlu0 %842
      %v844 = vsel %vm557, %v841, 0
      %v846 = vsel %vm557, %v843, 0
      %848 = vmatprep.subr.mxu0 0.0
      %849 = vmatpush1.xpose.msra.mxu0 %v846
      %850 = vmatprep.subr.mxu0 0.0
      %851 = vmatpush1.xpose.msra.mxu0 0.0
      %852 = vmatprep.subr.mxu0 0.0
      %853 = vmatpush1.xpose.msra.mxu0 0.0
      %854 = vmatprep.subr.mxu0 0.0
      %855 = vmatpush1.xpose.msra.mxu0 0.0
      %856 = vmatprep.subr.mxu0 0.0
      %857 = vmatpush1.xpose.msra.mxu0 0.0
      %858 = vmatprep.subr.mxu0 0.0
      %859 = vmatpush1.xpose.msra.mxu0 0.0
      %860 = vmatprep.subr.mxu0 0.0
      %861 = vmatpush1.xpose.msra.mxu0 0.0
      %862 = vmatprep.subr.mxu0 0.0
      %863 = vmatpush1.xpose.msra.mxu0 0.0
      %864 = vmatprep.subr.mxu0 0.0
      %865 = vmatpush1.xpose.msra.mxu0 0.0
      %866 = vmatprep.subr.mxu0 0.0
      %867 = vmatpush1.xpose.msra.mxu0 0.0
      %868 = vmatprep.subr.mxu0 0.0
      %869 = vmatpush1.xpose.msra.mxu0 0.0
      %870 = vmatprep.subr.mxu0 0.0
      %871 = vmatpush1.xpose.msra.mxu0 0.0
      %872 = vmatprep.subr.mxu0 0.0
      %873 = vmatpush1.xpose.msra.mxu0 0.0
      %874 = vmatprep.subr.mxu0 0.0
      %875 = vmatpush1.xpose.msra.mxu0 0.0
      %876 = vmatprep.subr.mxu0 0.0
      %877 = vmatpush1.xpose.msra.mxu0 0.0
      %878 = vmatprep.subr.mxu0 0.0
      %879 = vmatpush1.xpose.msra.mxu0 0.0
      %880 = vmatprep.subr.mxu0 0.0
      %881 = vmatpush1.xpose.msra.mxu0 0.0
      %882 = vmatprep.subr.mxu0 0.0
      %883 = vmatpush1.xpose.msra.mxu0 0.0
      %884 = vmatprep.subr.mxu0 0.0
      %885 = vmatpush1.xpose.msra.mxu0 0.0
      %886 = vmatprep.subr.mxu0 0.0
      %887 = vmatpush1.xpose.msra.mxu0 0.0
      %888 = vmatprep.subr.mxu0 0.0
      %889 = vmatpush1.xpose.msra.mxu0 0.0
      %890 = vmatprep.subr.mxu0 0.0
      %891 = vmatpush1.xpose.msra.mxu0 0.0
      %892 = vmatprep.subr.mxu0 0.0
      %893 = vmatpush1.xpose.msra.mxu0 0.0
      %894 = vmatprep.subr.mxu0 0.0
      %895 = vmatpush1.xpose.msra.mxu0 0.0
      %896 = vmatprep.subr.mxu0 0.0
      %897 = vmatpush1.xpose.msra.mxu0 0.0
      %898 = vmatprep.subr.mxu0 0.0
      %899 = vmatpush1.xpose.msra.mxu0 0.0
      %900 = vmatprep.subr.mxu0 0.0
      %901 = vmatpush1.xpose.msra.mxu0 0.0
      %902 = vmatprep.subr.mxu0 0.0
      %903 = vmatpush1.xpose.msra.mxu0 0.0
      %904 = vmatprep.subr.mxu0 0.0
      %905 = vmatpush1.xpose.msra.mxu0 0.0
      %906 = vmatprep.subr.mxu0 0.0
      %907 = vmatpush1.xpose.msra.mxu0 0.0
      %908 = vmatprep.subr.mxu0 0.0
      %909 = vmatpush1.xpose.msra.mxu0 0.0
      %910 = vmatprep.subr.mxu0 0.0
      %911 = vmatpush1.xpose.msra.mxu0 0.0
      %912 = vmatprep.mubr.f32.mxu0 0.0
      %913 = vmatmul.mubr.f32.gmra.mrb[0].mxu0 %v844
      %v914 = vpop.f32.mrb[0].mxu0
      %v915 = vadd.f32 %v552, %v914
      %v916 = vpop.f32.mrb[0].mxu0
      %917 = vdwg.mxu0
      %v918 = vsel %vm557, %v915, -inf
      %919 = vmax.xlane.f32.xlu0 %v918
      %v920 = vpop.xlane.xlu0 %919
      %v921 = vsub.f32 %v915, %v920
      %v922 = vmul.f32 %v921, 1.442695
      %v923 = vpow.pop %v922
      %v924 = vsel %vm557, %v923, 0.0
      %925 = vadd.xlane.f32.xlu0 %v924
      %v926 = vpop.xlane.xlu0 %925
      %v927 = vrcp.pop %v926
      %v928 = vmul.f32 %v923, %v927
      %v929 = vpack.c.bf16 %v928, %v928
      %930 = vrot.lane.b32.xlu0 %v644, 48
      %v931 = vpop.permute.xlu0 %930
      %v933 = vsel %vm557, %v929, 0
      %v936 = vsel %vm651, %v931, 0
      %938 = vmatprep.subr.bf16.mxu0 0
      %939 = vmatpush1.bf16.msra.mxu0 %v936
      %940 = vmatprep.subr.bf16.mxu0 0
      %941 = vmatpush1.bf16.msra.mxu0 0
      %942 = vmatprep.subr.bf16.mxu0 0
      %943 = vmatpush1.bf16.msra.mxu0 0
      %944 = vmatprep.subr.bf16.mxu0 0
      %945 = vmatpush1.bf16.msra.mxu0 0
      %946 = vmatprep.subr.bf16.mxu0 0
      %947 = vmatpush1.bf16.msra.mxu0 0
      %948 = vmatprep.subr.bf16.mxu0 0
      %949 = vmatpush1.bf16.msra.mxu0 0
      %950 = vmatprep.subr.bf16.mxu0 0
      %951 = vmatpush1.bf16.msra.mxu0 0
      %952 = vmatprep.subr.bf16.mxu0 0
      %953 = vmatpush1.bf16.msra.mxu0 0
      %954 = vmatprep.subr.bf16.mxu0 0
      %955 = vmatpush1.bf16.msra.mxu0 0
      %956 = vmatprep.subr.bf16.mxu0 0
      %957 = vmatpush1.bf16.msra.mxu0 0
      %958 = vmatprep.subr.bf16.mxu0 0
      %959 = vmatpush1.bf16.msra.mxu0 0
      %960 = vmatprep.subr.bf16.mxu0 0
      %961 = vmatpush1.bf16.msra.mxu0 0
      %962 = vmatprep.subr.bf16.mxu0 0
      %963 = vmatpush1.bf16.msra.mxu0 0
      %964 = vmatprep.subr.bf16.mxu0 0
      %965 = vmatpush1.bf16.msra.mxu0 0
      %966 = vmatprep.subr.bf16.mxu0 0
      %967 = vmatpush1.bf16.msra.mxu0 0
      %968 = vmatprep.subr.bf16.mxu0 0
      %969 = vmatpush1.bf16.msra.mxu0 0
      %970 = vmatprep.mubr.bf16.mxu0 0
      %971 = vmatmul.mubr.bf16.gmra.mrb[0].mxu0 %v933
      %v972 = vpop.f32.mrb[0].mxu0
      %v973 = vadd.f32 0.0, %v972
      %v974 = vpop.f32.mrb[0].mxu0
      %v975 = vpop.f32.mrb[0].mxu0
      %v976 = vpop.f32.mrb[0].mxu0
      %977 = vdwg.mxu0
      %979 = vrot.lane.b32.xlu0 %v973, 16
      %v980 = vpop.permute.xlu0 %979
      %vm982 = vcmask 195712
      %983 = vst.msk [vmem:[#allocation2] sm:$0xff] %vm982, %v980
      %984 = vrot.lane.b32.xlu0 %v543, 104
      %v985 = vpop.permute.xlu0 %984
      %986 = vrot.lane.b32.xlu0 %v543, 72
      %v987 = vpop.permute.xlu0 %986
      %v988 = vsel %vm557, %v985, 0
      %v990 = vsel %vm557, %v987, 0
      %992 = vmatprep.subr.mxu0 0.0
      %993 = vmatpush1.xpose.msra.mxu0 %v990
      %994 = vmatprep.subr.mxu0 0.0
      %995 = vmatpush1.xpose.msra.mxu0 0.0
      %996 = vmatprep.subr.mxu0 0.0
      %997 = vmatpush1.xpose.msra.mxu0 0.0
      %998 = vmatprep.subr.mxu0 0.0
      %999 = vmatpush1.xpose.msra.mxu0 0.0
      %1000 = vmatprep.subr.mxu0 0.0
      %1001 = vmatpush1.xpose.msra.mxu0 0.0
      %1002 = vmatprep.subr.mxu0 0.0
      %1003 = vmatpush1.xpose.msra.mxu0 0.0
      %1004 = vmatprep.subr.mxu0 0.0
      %1005 = vmatpush1.xpose.msra.mxu0 0.0
      %1006 = vmatprep.subr.mxu0 0.0
      %1007 = vmatpush1.xpose.msra.mxu0 0.0
      %1008 = vmatprep.subr.mxu0 0.0
      %1009 = vmatpush1.xpose.msra.mxu0 0.0
      %1010 = vmatprep.subr.mxu0 0.0
      %1011 = vmatpush1.xpose.msra.mxu0 0.0
      %1012 = vmatprep.subr.mxu0 0.0
      %1013 = vmatpush1.xpose.msra.mxu0 0.0
      %1014 = vmatprep.subr.mxu0 0.0
      %1015 = vmatpush1.xpose.msra.mxu0 0.0
      %1016 = vmatprep.subr.mxu0 0.0
      %1017 = vmatpush1.xpose.msra.mxu0 0.0
      %1018 = vmatprep.subr.mxu0 0.0
      %1019 = vmatpush1.xpose.msra.mxu0 0.0
      %1020 = vmatprep.subr.mxu0 0.0
      %1021 = vmatpush1.xpose.msra.mxu0 0.0
      %1022 = vmatprep.subr.mxu0 0.0
      %1023 = vmatpush1.xpose.msra.mxu0 0.0
      %1024 = vmatprep.subr.mxu0 0.0
      %1025 = vmatpush1.xpose.msra.mxu0 0.0
      %1026 = vmatprep.subr.mxu0 0.0
      %1027 = vmatpush1.xpose.msra.mxu0 0.0
      %1028 = vmatprep.subr.mxu0 0.0
      %1029 = vmatpush1.xpose.msra.mxu0 0.0
      %1030 = vmatprep.subr.mxu0 0.0
      %1031 = vmatpush1.xpose.msra.mxu0 0.0
      %1032 = vmatprep.subr.mxu0 0.0
      %1033 = vmatpush1.xpose.msra.mxu0 0.0
      %1034 = vmatprep.subr.mxu0 0.0
      %1035 = vmatpush1.xpose.msra.mxu0 0.0
      %1036 = vmatprep.subr.mxu0 0.0
      %1037 = vmatpush1.xpose.msra.mxu0 0.0
      %1038 = vmatprep.subr.mxu0 0.0
      %1039 = vmatpush1.xpose.msra.mxu0 0.0
      %1040 = vmatprep.subr.mxu0 0.0
      %1041 = vmatpush1.xpose.msra.mxu0 0.0
      %1042 = vmatprep.subr.mxu0 0.0
      %1043 = vmatpush1.xpose.msra.mxu0 0.0
      %1044 = vmatprep.subr.mxu0 0.0
      %1045 = vmatpush1.xpose.msra.mxu0 0.0
      %1046 = vmatprep.subr.mxu0 0.0
      %1047 = vmatpush1.xpose.msra.mxu0 0.0
      %1048 = vmatprep.subr.mxu0 0.0
      %1049 = vmatpush1.xpose.msra.mxu0 0.0
      %1050 = vmatprep.subr.mxu0 0.0
      %1051 = vmatpush1.xpose.msra.mxu0 0.0
      %1052 = vmatprep.subr.mxu0 0.0
      %1053 = vmatpush1.xpose.msra.mxu0 0.0
      %1054 = vmatprep.subr.mxu0 0.0
      %1055 = vmatpush1.xpose.msra.mxu0 0.0
      %1056 = vmatprep.mubr.f32.mxu0 0.0
      %1057 = vmatmul.mubr.f32.gmra.mrb[0].mxu0 %v988
      %v1058 = vpop.f32.mrb[0].mxu0
      %v1059 = vadd.f32 %v552, %v1058
      %v1060 = vpop.f32.mrb[0].mxu0
      %1061 = vdwg.mxu0
      %v1062 = vsel %vm557, %v1059, -inf
      %1063 = vmax.xlane.f32.xlu0 %v1062
      %v1064 = vpop.xlane.xlu0 %1063
      %v1065 = vsub.f32 %v1059, %v1064
      %v1066 = vmul.f32 %v1065, 1.442695
      %v1067 = vpow.pop %v1066
      %v1068 = vsel %vm557, %v1067, 0.0
      %1069 = vadd.xlane.f32.xlu0 %v1068
      %v1070 = vpop.xlane.xlu0 %1069
      %v1071 = vrcp.pop %v1070
      %v1072 = vmul.f32 %v1067, %v1071
      %v1073 = vpack.c.bf16 %v1072, %v1072
      %1074 = vrot.lane.b32.xlu0 %v644, 40
      %v1075 = vpop.permute.xlu0 %1074
      %v1077 = vsel %vm557, %v1073, 0
      %v1080 = vsel %vm651, %v1075, 0
      %1082 = vmatprep.subr.bf16.mxu0 0
      %1083 = vmatpush1.bf16.msra.mxu0 %v1080
      %1084 = vmatprep.subr.bf16.mxu0 0
      %1085 = vmatpush1.bf16.msra.mxu0 0
      %1086 = vmatprep.subr.bf16.mxu0 0
      %1087 = vmatpush1.bf16.msra.mxu0 0
      %1088 = vmatprep.subr.bf16.mxu0 0
      %1089 = vmatpush1.bf16.msra.mxu0 0
      %1090 = vmatprep.subr.bf16.mxu0 0
      %1091 = vmatpush1.bf16.msra.mxu0 0
      %1092 = vmatprep.subr.bf16.mxu0 0
      %1093 = vmatpush1.bf16.msra.mxu0 0
      %1094 = vmatprep.subr.bf16.mxu0 0
      %1095 = vmatpush1.bf16.msra.mxu0 0
      %1096 = vmatprep.subr.bf16.mxu0 0
      %1097 = vmatpush1.bf16.msra.mxu0 0
      %1098 = vmatprep.subr.bf16.mxu0 0
      %1099 = vmatpush1.bf16.msra.mxu0 0
      %1100 = vmatprep.subr.bf16.mxu0 0
      %1101 = vmatpush1.bf16.msra.mxu0 0
      %1102 = vmatprep.subr.bf16.mxu0 0
      %1103 = vmatpush1.bf16.msra.mxu0 0
      %1104 = vmatprep.subr.bf16.mxu0 0
      %1105 = vmatpush1.bf16.msra.mxu0 0
      %1106 = vmatprep.subr.bf16.mxu0 0
      %1107 = vmatpush1.bf16.msra.mxu0 0
      %1108 = vmatprep.subr.bf16.mxu0 0
      %1109 = vmatpush1.bf16.msra.mxu0 0
      %1110 = vmatprep.subr.bf16.mxu0 0
      %1111 = vmatpush1.bf16.msra.mxu0 0
      %1112 = vmatprep.subr.bf16.mxu0 0
      %1113 = vmatpush1.bf16.msra.mxu0 0
      %1114 = vmatprep.mubr.bf16.mxu0 0
      %1115 = vmatmul.mubr.bf16.gmra.mrb[0].mxu0 %v1077
      %v1116 = vpop.f32.mrb[0].mxu0
      %v1117 = vadd.f32 0.0, %v1116
      %v1118 = vpop.f32.mrb[0].mxu0
      %v1119 = vpop.f32.mrb[0].mxu0
      %v1120 = vpop.f32.mrb[0].mxu0
      %1121 = vdwg.mxu0
      %1123 = vrot.lane.b32.xlu0 %v1117, 24
      %v1124 = vpop.permute.xlu0 %1123
      %vm1126 = vcmask 261312
      %1127 = vst.msk [vmem:[#allocation2] sm:$0xff] %vm1126, %v1124
      %v1128 = vld [vmem:[#allocation2] sm:$0xff]
      %v1129 = vpack.c.bf16 %v1128, %v1128
      %v1130 = vld [vmem:[%s4] sm:$0xf]
      %v1131 = vld [vmem:[%s4 + $0x4] sm:$0xf]
      %v1132 = vld [vmem:[%s4 + $0x8] sm:$0xf]
      %v1133 = vld [vmem:[%s4 + $0xc] sm:$0xf]
      %v1134 = vld [vmem:[%s5] sm:$0x1]
      %v1136 = vlaneseq
      %v1137 = vshrl.u32 %v1136, 7
      %v1138 = vsub.s32 0, %v1137
      %v1139 = vrot.slane %v1134, %v1138
      %v1145 = vunpack.c.l.b16 %v1130
      %v1146 = vunpack.c.l.b16 %v1131
      %v1147 = vunpack.c.l.b16 %v1132
      %v1148 = vunpack.c.l.b16 %v1133
      %v1149 = vpack.c.b16 %v1146, %v1145
      %v1150 = vpack.c.b16 %v1148, %v1147
      %v1154 = vsel %vm504, %v1129, 0
      %1156 = vmatprep.subr.bf16.mxu0 0
      %1157 = vmatpush1.bf16.msra.mxu0 %v1149
      %1158 = vmatprep.subr.bf16.mxu0 0
      %1159 = vmatpush1.bf16.msra.mxu0 %v1150
      %1160 = vmatprep.subr.bf16.mxu0 0
      %1161 = vmatpush1.bf16.msra.mxu0 0
      %1162 = vmatprep.subr.bf16.mxu0 0
      %1163 = vmatpush1.bf16.msra.mxu0 0
      %1164 = vmatprep.subr.bf16.mxu0 0
      %1165 = vmatpush1.bf16.msra.mxu0 0
      %1166 = vmatprep.subr.bf16.mxu0 0
      %1167 = vmatpush1.bf16.msra.mxu0 0
      %1168 = vmatprep.subr.bf16.mxu0 0
      %1169 = vmatpush1.bf16.msra.mxu0 0
      %1170 = vmatprep.subr.bf16.mxu0 0
      %1171 = vmatpush1.bf16.msra.mxu0 0
      %1172 = vmatprep.subr.bf16.mxu0 0
      %1173 = vmatpush1.bf16.msra.mxu0 0
      %1174 = vmatprep.subr.bf16.mxu0 0
      %1175 = vmatpush1.bf16.msra.mxu0 0
      %1176 = vmatprep.subr.bf16.mxu0 0
      %1177 = vmatpush1.bf16.msra.mxu0 0
      %1178 = vmatprep.subr.bf16.mxu0 0
      %1179 = vmatpush1.bf16.msra.mxu0 0
      %1180 = vmatprep.subr.bf16.mxu0 0
      %1181 = vmatpush1.bf16.msra.mxu0 0
      %1182 = vmatprep.subr.bf16.mxu0 0
      %1183 = vmatpush1.bf16.msra.mxu0 0
      %1184 = vmatprep.subr.bf16.mxu0 0
      %1185 = vmatpush1.bf16.msra.mxu0 0
      %1186 = vmatprep.subr.bf16.mxu0 0
      %1187 = vmatpush1.bf16.msra.mxu0 0
      %1188 = vmatprep.mubr.bf16.mxu0 0
      %1189 = vmatmul.mubr.bf16.gmra.mrb[0].mxu0 %v1154
      %v1190 = vpop.f32.mrb[0].mxu0
      %v1191 = vadd.f32 %v1139, %v1190
      %v1192 = vpop.f32.mrb[0].mxu0
      %v1193 = vpop.f32.mrb[0].mxu0
      %v1194 = vpop.f32.mrb[0].mxu0
      %1195 = vdwg.mxu0
      %v1196 = vadd.f32 %v479, %v1191
      %v1197 = vld [vmem:[%s6] sm:$0x1]
      %v1198 = vld [vmem:[%s7] sm:$0x1]
      %v1199 = vsel %vm504, %v1196, 0.0
      %1200 = vadd.xlane.f32.xlu0 %v1199
      %v1201 = vpop.xlane.xlu0 %1200
      %v1202 = vrcp.pop 32.0
      %v1203 = vmul.f32 %v1201, %v1202
      %v1204 = vsub.f32 %v1196, %v1203
      %v1205 = vmul.f32 %v1204, %v1204
      %v1206 = vsel %vm504, %v1205, 0.0
      %1207 = vadd.xlane.f32.xlu0 %v1206
      %v1208 = vpop.xlane.xlu0 %1207
      %v1209 = vmul.f32 %v1208, %v1202
      %v1210 = vadd.f32 %v1209, 1e-12
      %v1211 = vrsqrt.pop %v1210
      %v1212 = vmul.f32 %v1204, %v1211
      %v1214 = vlaneseq
      %v1215 = vshrl.u32 %v1214, 7
      %v1216 = vsub.s32 0, %v1215
      %v1217 = vrot.slane %v1197, %v1216
      %v1219 = vmul.f32 %v1212, %v1217
      %v1221 = vlaneseq
      %v1222 = vshrl.u32 %v1221, 7
      %v1223 = vsub.s32 0, %v1222
      %v1224 = vrot.slane %v1198, %v1223
      %v1226 = vadd.f32 %v1219, %v1224
      %v1227 = vpack.c.bf16 %v1226, %v1226
      %v1228 = vld [vmem:[%s8] sm:$0xf]
      %v1229 = vld [vmem:[%s8 + $0x4] sm:$0xf]
      %v1230 = vld [vmem:[%s8 + $0x8] sm:$0xf]
      %v1231 = vld [vmem:[%s8 + $0xc] sm:$0xf]
      %v1232 = vld [vmem:[%s9] sm:$0x1]
      %v1234 = vlaneseq
      %v1235 = vshrl.u32 %v1234, 7
      %v1236 = vsub.s32 0, %v1235
      %v1237 = vrot.slane %v1232, %v1236
      %v1243 = vunpack.c.l.b16 %v1228
      %v1244 = vunpack.c.l.b16 %v1229
      %v1245 = vunpack.c.l.b16 %v1230
      %v1246 = vunpack.c.l.b16 %v1231
      %v1247 = vpack.c.b16 %v1244, %v1243
      %v1248 = vpack.c.b16 %v1246, %v1245
      %v1252 = vsel %vm504, %v1227, 0
      %1254 = vmatprep.subr.bf16.mxu0 0
      %1255 = vmatpush1.bf16.msra.mxu0 %v1247
      %1256 = vmatprep.subr.bf16.mxu0 0
      %1257 = vmatpush1.bf16.msra.mxu0 %v1248
      %1258 = vmatprep.subr.bf16.mxu0 0
      %1259 = vmatpush1.bf16.msra.mxu0 0
      %1260 = vmatprep.subr.bf16.mxu0 0
      %1261 = vmatpush1.bf16.msra.mxu0 0
      %1262 = vmatprep.subr.bf16.mxu0 0
      %1263 = vmatpush1.bf16.msra.mxu0 0
      %1264 = vmatprep.subr.bf16.mxu0 0
      %1265 = vmatpush1.bf16.msra.mxu0 0
      %1266 = vmatprep.subr.bf16.mxu0 0
      %1267 = vmatpush1.bf16.msra.mxu0 0
      %1268 = vmatprep.subr.bf16.mxu0 0
      %1269 = vmatpush1.bf16.msra.mxu0 0
      %1270 = vmatprep.subr.bf16.mxu0 0
      %1271 = vmatpush1.bf16.msra.mxu0 0
      %1272 = vmatprep.subr.bf16.mxu0 0
      %1273 = vmatpush1.bf16.msra.mxu0 0
      %1274 = vmatprep.subr.bf16.mxu0 0
      %1275 = vmatpush1.bf16.msra.mxu0 0
      %1276 = vmatprep.subr.bf16.mxu0 0
      %1277 = vmatpush1.bf16.msra.mxu0 0
      %1278 = vmatprep.subr.bf16.mxu0 0
      %1279 = vmatpush1.bf16.msra.mxu0 0
      %1280 = vmatprep.subr.bf16.mxu0 0
      %1281 = vmatpush1.bf16.msra.mxu0 0
      %1282 = vmatprep.subr.bf16.mxu0 0
      %1283 = vmatpush1.bf16.msra.mxu0 0
      %1284 = vmatprep.subr.bf16.mxu0 0
      %1285 = vmatpush1.bf16.msra.mxu0 0
      %1286 = vmatprep.mubr.bf16.mxu0 0
      %1287 = vmatmul.mubr.bf16.gmra.mrb[0].mxu0 %v1252
      %v1288 = vpop.f32.mrb[0].mxu0
      %v1289 = vadd.f32 %v1237, %v1288
      %v1290 = vpop.f32.mrb[0].mxu0
      %v1291 = vpop.f32.mrb[0].mxu0
      %v1292 = vpop.f32.mrb[0].mxu0
      %1293 = vdwg.mxu0
      %v1294 = vmul.f32 %v1289, 0.5
      %v1295 = vmul.f32 %v1289, 0.70710677
      %v1296 = verf.f32.pop %v1295
      %v1297 = vadd.f32 %v1296, 1.0
      %v1298 = vmul.f32 %v1294, %v1297
      %v1299 = vpack.c.bf16 %v1298, %v1298
      %v1300 = vld [vmem:[%s10] sm:$0xf]
      %v1301 = vld [vmem:[%s10 + $0x4] sm:$0xf]
      %v1302 = vld [vmem:[%s10 + $0x8] sm:$0xf]
      %v1303 = vld [vmem:[%s10 + $0xc] sm:$0xf]
      %v1304 = vld [vmem:[%s10 + $0x10] sm:$0xf]
      %v1305 = vld [vmem:[%s10 + $0x14] sm:$0xf]
      %v1306 = vld [vmem:[%s10 + $0x18] sm:$0xf]
      %v1307 = vld [vmem:[%s10 + $0x1c] sm:$0xf]
      %v1308 = vld [vmem:[%s11] sm:$0x1]
      %v1310 = vlaneseq
      %v1311 = vshrl.u32 %v1310, 7
      %v1312 = vsub.s32 0, %v1311
      %v1313 = vrot.slane %v1308, %v1312
      %v1323 = vunpack.c.l.b16 %v1300
      %v1324 = vunpack.c.l.b16 %v1301
      %v1325 = vunpack.c.l.b16 %v1302
      %v1326 = vunpack.c.l.b16 %v1303
      %v1327 = vunpack.c.l.b16 %v1304
      %v1328 = vunpack.c.l.b16 %v1305
      %v1329 = vunpack.c.l.b16 %v1306
      %v1330 = vunpack.c.l.b16 %v1307
      %v1331 = vpack.c.b16 %v1324, %v1323
      %v1332 = vpack.c.b16 %v1326, %v1325
      %v1333 = vpack.c.b16 %v1328, %v1327
      %v1334 = vpack.c.b16 %v1330, %v1329
      %vm1339 = vcmask 523264
      %v1341 = vsel %vm1339, %v1299, 0
      %1343 = vmatprep.subr.bf16.mxu0 0
      %1344 = vmatpush1.bf16.msra.mxu0 %v1331
      %1345 = vmatprep.subr.bf16.mxu0 0
      %1346 = vmatpush1.bf16.msra.mxu0 %v1332
      %1347 = vmatprep.subr.bf16.mxu0 0
      %1348 = vmatpush1.bf16.msra.mxu0 %v1333
      %1349 = vmatprep.subr.bf16.mxu0 0
      %1350 = vmatpush1.bf16.msra.mxu0 %v1334
      %1351 = vmatprep.subr.bf16.mxu0 0
      %1352 = vmatpush1.bf16.msra.mxu0 0
      %1353 = vmatprep.subr.bf16.mxu0 0
      %1354 = vmatpush1.bf16.msra.mxu0 0
      %1355 = vmatprep.subr.bf16.mxu0 0
      %1356 = vmatpush1.bf16.msra.mxu0 0
      %1357 = vmatprep.subr.bf16.mxu0 0
      %1358 = vmatpush1.bf16.msra.mxu0 0
      %1359 = vmatprep.subr.bf16.mxu0 0
      %1360 = vmatpush1.bf16.msra.mxu0 0
      %1361 = vmatprep.subr.bf16.mxu0 0
      %1362 = vmatpush1.bf16.msra.mxu0 0
      %1363 = vmatprep.subr.bf16.mxu0 0
      %1364 = vmatpush1.bf16.msra.mxu0 0
      %1365 = vmatprep.subr.bf16.mxu0 0
      %1366 = vmatpush1.bf16.msra.mxu0 0
      %1367 = vmatprep.subr.bf16.mxu0 0
      %1368 = vmatpush1.bf16.msra.mxu0 0
      %1369 = vmatprep.subr.bf16.mxu0 0
      %1370 = vmatpush1.bf16.msra.mxu0 0
      %1371 = vmatprep.subr.bf16.mxu0 0
      %1372 = vmatpush1.bf16.msra.mxu0 0
      %1373 = vmatprep.subr.bf16.mxu0 0
      %1374 = vmatpush1.bf16.msra.mxu0 0
      %1375 = vmatprep.mubr.bf16.mxu0 0
      %1376 = vmatmul.mubr.bf16.gmra.mrb[0].mxu0 %v1341
      %v1377 = vpop.f32.mrb[0].mxu0
      %v1378 = vadd.f32 %v1313, %v1377
      %v1379 = vpop.f32.mrb[0].mxu0
      %v1380 = vpop.f32.mrb[0].mxu0
      %v1381 = vpop.f32.mrb[0].mxu0
      %1382 = vdwg.mxu0
      %v1383 = vadd.f32 %v1226, %v1378
      %v1384 = vld [vmem:[%s12] sm:$0x1]
      %v1385 = vld [vmem:[%s13] sm:$0x1]
      %v1386 = vsel %vm504, %v1383, 0.0
      %1387 = vadd.xlane.f32.xlu0 %v1386
      %v1388 = vpop.xlane.xlu0 %1387
      %v1389 = vmul.f32 %v1388, %v1202
      %v1390 = vsub.f32 %v1383, %v1389
      %v1391 = vmul.f32 %v1390, %v1390
      %v1392 = vsel %vm504, %v1391, 0.0
      %1393 = vadd.xlane.f32.xlu0 %v1392
      %v1394 = vpop.xlane.xlu0 %1393
      %v1395 = vmul.f32 %v1394, %v1202
      %v1396 = vadd.f32 %v1395, 1e-12
      %v1397 = vrsqrt.pop %v1396
      %v1398 = vmul.f32 %v1390, %v1397
      %v1400 = vlaneseq
      %v1401 = vshrl.u32 %v1400, 7
      %v1402 = vsub.s32 0, %v1401
      %v1403 = vrot.slane %v1384, %v1402
      %v1405 = vmul.f32 %v1398, %v1403
      %v1407 = vlaneseq
      %v1408 = vshrl.u32 %v1407, 7
      %v1409 = vsub.s32 0, %v1408
      %v1410 = vrot.slane %v1385, %v1409
      %v1412 = vadd.f32 %v1405, %v1410
      %v1413 = vpack.c.bf16 %v1412, %v1412
      %vm1414 = vcmask 257024
      %1415 = vst.msk [vmem:[%s476] sm:$0xf] %vm1414, %v1413
      %p1416 = scmp.lt.s32.totalorder %s25, 1
      %s1417 = scalar_select %p1416, %s25, 1
      %s1418 = smul.addr %s1417, 4
      %s1419 = scalar_lea.vmem %s14, %s1418
      // Predicated region
      $region77: #{_lambda_.5} parent=75 // pred_check
        %p1420 = pneg %p347
      $region78: #{_lambda_.5} parent=75 // pred_check_branch
        %1422 = sbr.rel (%p1420) target = $region80
      $region79: #{_lambda_.5} parent=75 // pred_region
        _
      $region80: #{_lambda_.5} parent=75 // pred_fallthru
        _
    $region76: #{_lambda_.5} parent=5 // pred_fallthru
      _
    %p1423 = scmp.le.s32.totalorder 2, %s20
    // Predicated region
    $region81: #{_lambda_.5} parent=5 // pred_check
      %p1424 = pneg %p1423
    $region82: #{_lambda_.5} parent=5 // pred_check_branch
      %1426 = sbr.rel (%p1424) target = $region84
    $region83: #{_lambda_.5} parent=5 // pred_region
      %s1427 = ssub.s32 %s20, 2
      // Predicated region
      $region85: #{_lambda_.5} parent=83 // pred_check
        %p1428 = pneg %p353
      $region86: #{_lambda_.5} parent=83 // pred_check_branch
        %1430 = sbr.rel (%p1428) target = $region88
      $region87: #{_lambda_.5} parent=83 // pred_region
        %p1431 = scmp.lt.s32.totalorder %s26, 1
        %s1432 = scalar_select %p1431, %s26, 1
        %s1433 = smul.addr %s1432, 4
        %s1434 = scalar_lea.vmem %s14, %s1433
      $region88: #{_lambda_.5} parent=83 // pred_fallthru
        _
    $region84: #{_lambda_.5} parent=5 // pred_fallthru
      _
  $region6: #{_lambda_.5} parent=0 // loop_footer
    %s24 = sadd.s32 1, %s20
  $region7: #{_lambda_.5} parent=0 // loop_footer_branch
    %19 = sbr.rel target = $region3
  $region8: #{_lambda_.5} parent=0 // loop_exit
    _

</llo_original>
